<compile_context>
chip_gen: v5e
topology: v5e:2x2
jax: 0.10.0
libtpu: 0.0.40
codegen_flags: <defaults>
</compile_context>

<pallas_src>
import jax
import jax.numpy as jnp
from jax import lax
from jax.experimental import pallas as pl
from jax.experimental.pallas import tpu as pltpu

IGNORE_INDEX = 255
LANE = 128
BCE_ELEM_CAP = 2048 * LANE            # elements per BCE tile (~1 MiB f32 per operand)


def _tpu_vmem_bytes():
    try:
        return int(pltpu.get_tpu_info().vmem_capacity_bytes)
    except Exception:
        return 0


_VMEM_PHYS = _tpu_vmem_bytes()
if _VMEM_PHYS >= 100 * 1024 * 1024:        # v5e / v6e: 128 MiB physical VMEM
    VMEM_LIMIT = 96 * 1024 * 1024
    TILE_P_CAP = 32768
elif _VMEM_PHYS > 0:                       # v7x: 64 MiB physical -> leave headroom
    VMEM_LIMIT = 44 * 1024 * 1024
    TILE_P_CAP = 16384
else:                                      # query failed: conservative defaults
    VMEM_LIMIT = None
    TILE_P_CAP = 8192


def _cdiv(a, b):
    return -(-a // b)


def _compiler_params(sem):
    return pltpu.CompilerParams(dimension_semantics=sem, vmem_limit_bytes=VMEM_LIMIT)


def _pixel_tile(hw, c):
    """Lane-aligned pixel-tile size, as large as the VMEM budget allows."""
    budget = VMEM_LIMIT if VMEM_LIMIT is not None else 16 * 1024 * 1024
    per_pixel = max(c, 1) * 4 * 14         # double-buffered (C,T) inputs + intermediates
    cap = min(TILE_P_CAP, max(LANE, (budget // per_pixel) // LANE * LANE))
    return hw if hw <= cap else cap        # tile == full dim is always a legal block


def _stack_rows(*rows):
    """Stack k (1, L) arrays into (k, L) via sublane broadcast + select (avoids a
    sublane-axis concatenate inside the kernel; one lane-dense store afterwards)."""
    k = len(rows)
    shape = (k,) + rows[0].shape[1:]
    ridx = lax.broadcasted_iota(jnp.int32, shape, 0)
    out = jnp.broadcast_to(rows[-1], shape)
    for i in range(k - 2, -1, -1):
        out = jnp.where(ridx == i, jnp.broadcast_to(rows[i], shape), out)
    return out


# ----------------------------------------------------------------------------- #
# Pallas kernels
# ----------------------------------------------------------------------------- #
def fused_softmax_gather(logits, seg_lab, att_lab):
    """One softmax pass over seg_in, gathering prob / -log_softmax at TWO target sets
    (seg OHEM + edge-attention OHEM). Classes ride sublanes, pixels ride lanes.

    logits: (N, C, HW); labels: (N, 1, HW) int32 (255 = ignore).
    Returns (N, 4, HW) f32: rows = [prob_seg, nll_seg, prob_att, nll_att].
    """
    N, C, HW = logits.shape
    tile = _pixel_tile(HW, C)
    grid = (N, _cdiv(HW, tile))

    def kernel(x_ref, seg_ref, att_ref, out_ref):
        x = x_ref[...].astype(jnp.float32)                     # (C, T)
        m = jnp.max(x, axis=0, keepdims=True)                  # (1, T)
        log_s = jnp.log(jnp.sum(jnp.exp(x - m), axis=0, keepdims=True))
        cls = lax.broadcasted_iota(jnp.int32, x.shape, 0)      # class id per sublane

        def gather(lab_ref):
            lab = lab_ref[...]                                 # (1, T) int32
            lab_c = jnp.where(lab != IGNORE_INDEX, lab, 0)     # clamp ignore -> class 0
            sel = (cls == lab_c).astype(jnp.float32)           # in-kernel one-hot
            z = jnp.sum(x * sel, axis=0, keepdims=True) - m - log_s  # log_softmax @ target
            return jnp.exp(z), -z                              # prob, nll (no full softmax)

        p_s, n_s = gather(seg_ref)
        p_a, n_a = gather(att_ref)
        out_ref[...] = _stack_rows(p_s, n_s, p_a, n_a)         # single lane-dense store

    lab_spec = pl.BlockSpec((None, 1, tile), lambda n, p: (n, 0, p))
    return pl.pallas_call(
        kernel,
        out_shape=jax.ShapeDtypeStruct((N, 4, HW), jnp.float32),
        grid=grid,
        in_specs=[pl.BlockSpec((None, C, tile), lambda n, p: (n, 0, p)),
                  lab_spec, lab_spec],
        out_specs=pl.BlockSpec((None, 4, tile), lambda n, p: (n, 0, p)),
        compiler_params=_compiler_params(("parallel", "parallel")),
    )(logits, seg_lab, att_lab)


def soft_nll_partial_sums(logits, target_r, cw, inv_bw_sum):
    """Relaxed soft-NLL (customsoftmax) in log-space; emits per-image lane-partial sums.

    logits (N,C,HW); target_r (N,C+1,HW) multi-hot one-hot+border; cw (N,C,1);
    inv_bw_sum (1,HW) carrying sum_n(1/border_weights[n]).
    Returns (N, 1, tile) f32 per-image partial sums (reduce lanes in JAX).
    """
    N, C, HW = logits.shape
    tile = _pixel_tile(HW, C)
    grid = (N, _cdiv(HW, tile))

    def kernel(x_ref, t_ref, cw_ref, bw_ref, acc_ref):
        p = pl.program_id(1)

        @pl.when(p == 0)
        def _init():
            acc_ref[...] = jnp.zeros_like(acc_ref)

        x = x_ref[...].astype(jnp.float32)                     # (C, T)
        t = t_ref[0:C, :].astype(jnp.float32)                  # first C channels (multi-hot)
        cwv = cw_ref[...]                                      # (C, 1) per-image class weights
        m = jnp.max(x, axis=0, keepdims=True)
        e = jnp.exp(x - m)
        log_s = jnp.log(jnp.sum(e, axis=0, keepdims=True))     # (1, T)
        num = jnp.sum(e * t, axis=0, keepdims=True)            # = s * sum(softmax * t)
        # log-space customsoftmax (only t==1 positions contribute to the loss):
        #   log(max(softmax_c, sum(softmax*t))) = max(x_c - m, log(num)) - log_s
        cs = jnp.maximum(x - m, jnp.log(num)) - log_s          # (C, T)
        term = jnp.sum(t * cwv * cs, axis=0, keepdims=True)    # (1, T)
        not_ignored = jnp.sum(t, axis=0, keepdims=True) > 0.0  # (1 - ignore_mask)
        lane = lax.broadcasted_iota(jnp.int32, term.shape, 1)
        in_bounds = (p * tile + lane) < HW                     # ragged last tile
        contrib = -bw_ref[...] * term                          # bw = sum_n 1/border_weights
        acc_ref[...] += jnp.where(jnp.logical_and(not_ignored, in_bounds), contrib, 0.0)

    return pl.pallas_call(
        kernel,
        out_shape=jax.ShapeDtypeStruct((N, 1, tile), jnp.float32),
        grid=grid,
        in_specs=[
            pl.BlockSpec((None, C, tile), lambda n, p: (n, 0, p)),
            pl.BlockSpec((None, C + 1, tile), lambda n, p: (n, 0, p)),
            pl.BlockSpec((None, C, 1), lambda n, p: (n, 0, 0)),
            pl.BlockSpec((1, tile), lambda n, p: (0, p)),
        ],
        out_specs=pl.BlockSpec((None, 1, tile), lambda n, p: (n, 0, 0)),
        compiler_params=_compiler_params(("parallel", "arbitrary")),
    )(logits, target_r, cw, inv_bw_sum)


def bce_partial_sums(x3, t3):
    """Single-pass weighted-BCE reduction. x3/t3: (N, H, W) logits / {0,1,ignore>1} targets.
    Returns (N, 4, W) per-lane partial sums: rows = [pos_bce, neg_bce, pos_cnt, neg_cnt].
    """
    N, H, W = x3.shape
    rows = max(1, BCE_ELEM_CAP // max(W, LANE))
    tile_h = H if rows >= H else max(8, (rows // 8) * 8)
    grid = (N, _cdiv(H, tile_h))

    def kernel(x_ref, t_ref, acc_ref):
        h = pl.program_id(1)

        @pl.when(h == 0)
        def _init():
            acc_ref[...] = jnp.zeros_like(acc_ref)

        x = x_ref[...].astype(jnp.float32)                     # (tile_h, W)
        t = t_ref[...].astype(jnp.float32)
        row = lax.broadcasted_iota(jnp.int32, x.shape, 0)
        in_bounds = (h * tile_h + row) < H                     # ragged last tile
        bce = jnp.maximum(x, 0.0) - x * t + jnp.log1p(jnp.exp(-jnp.abs(x)))
        pos = jnp.logical_and(in_bounds, t == 1.0)
        neg = jnp.logical_and(in_bounds, t == 0.0)
        zero = jnp.zeros_like(bce)
        one = jnp.ones_like(bce)
        acc_ref[...] += _stack_rows(
            jnp.sum(jnp.where(pos, bce, zero), axis=0, keepdims=True),
            jnp.sum(jnp.where(neg, bce, zero), axis=0, keepdims=True),
            jnp.sum(jnp.where(pos, one, zero), axis=0, keepdims=True),
            jnp.sum(jnp.where(neg, one, zero), axis=0, keepdims=True),
        )

    return pl.pallas_call(
        kernel,
        out_shape=jax.ShapeDtypeStruct((N, 4, W), jnp.float32),
        grid=grid,
        in_specs=[pl.BlockSpec((None, tile_h, W), lambda n, h: (n, h, 0)),
                  pl.BlockSpec((None, tile_h, W), lambda n, h: (n, h, 0))],
        out_specs=pl.BlockSpec((None, 4, W), lambda n, h: (n, 0, 0)),
        compiler_params=_compiler_params(("parallel", "arbitrary")),
    )(x3, t3)


# ----------------------------------------------------------------------------- #
# JAX glue reproducing the PyTorch module semantics
# ----------------------------------------------------------------------------- #
def onehot2label(target, ignore_index=IGNORE_INDEX):
    label = jnp.argmax(target[:, :-1], axis=1).astype(jnp.int32)
    border = target[:, -1] != 0                                # border channel marks ignore
    return jnp.where(border, ignore_index, label)


def _ohem_from_gathered(prob_t, nll_t, labels, min_kept, thresh=0.7):
    """OhemCrossEntropy2dTensor selection + mean CE from per-pixel prob/nll at target."""
    p_total = int(prob_t.shape[0])
    valid = labels != IGNORE_INDEX
    num_valid = jnp.sum(valid)
    mask_prob = jnp.where(valid, prob_t, 1.0)                  # masked_fill(~valid, 1)
    k = min(p_total, min_kept)
    neg_topk, _ = lax.top_k(-mask_prob, k)                     # k-th smallest prob, no full sort
    thr_val = -neg_topk[k - 1]
    threshold = jnp.where(thr_val > thresh, thr_val, thresh)
    kept = mask_prob <= threshold
    apply_ohem = num_valid >= min_kept                         # reference's `elif num_valid > 0`
    final_valid = jnp.where(apply_ohem, valid & kept, valid)
    fv = final_valid.astype(jnp.float32)
    # Reference yields 0/0 (NaN) for an all-ignored image; guard the denominator.
    return jnp.sum(nll_t * fv) / jnp.maximum(jnp.sum(fv), 1.0)


def img_wt_loss_soft_nll(inputs, target, upper_bound=1.0):
    """ImgWtLossSoftNLL.forward (train path, per-image weights) via one batched kernel."""
    N, C, H, W = inputs.shape
    HW = H * W

    # border weights / ignore mask (reference: weights = target[:, :-1].sum(1))
    border_w = jnp.sum(target[:, :C], axis=1, dtype=jnp.float32)     # (N, H, W)
    ignore_mask = border_w == 0
    border_w = jnp.where(ignore_mask, 1.0, border_w)
    # The reference multiplies each image's (1,H,W) loss term by the full-batch (N,H,W)
    # 1/weights and sums everything, which factorizes to term * sum_n(1/weights[n]).
    inv_bw_sum = jnp.sum(1.0 / border_w, axis=0).reshape(1, HW)

    # per-image calculate_weights()[:-1]  (norm=False branch)
    sums = jnp.sum(target, axis=(2, 3), dtype=jnp.float32)           # (N, C+1)
    hist = sums / jnp.sum(sums, axis=1, keepdims=True)
    cw = (hist != 0).astype(jnp.float32) * upper_bound * (1.0 - hist) + 1.0
    cw = cw[:, :C].reshape(N, C, 1)

    logits = inputs.reshape(N, C, HW)                 # free reshape, dtype kept
    target_r = target.reshape(N, C + 1, HW)           # full one-hot; sliced in-kernel

    acc = soft_nll_partial_sums(logits, target_r, cw, inv_bw_sum)    # (N, 1, tile)
    per_img = jnp.sum(acc.reshape(N, -1), axis=1)
    ignore_cnt = jnp.sum(ignore_mask.reshape(N, -1).astype(jnp.float32), axis=1)
    denom = 1.0 * H * W - ignore_cnt + 1.0             # per-image reference denominator
    return jnp.sum(per_img / denom)


def bce2d(edge_in, edgemask):
    """JointEdgeSegLoss.bce2d; counting + loss fused into one reduction kernel pass."""
    N, Ce, H, W = edge_in.shape
    x3 = edge_in.reshape(N * Ce, H, W)                 # Ce == 1 in the module
    t3 = edgemask.reshape(N * Ce, H, W)
    acc = bce_partial_sums(x3, t3)                     # (N*Ce, 4, W)
    sums = jnp.sum(acc, axis=(0, 2))                   # (4,)
    pos_loss, neg_loss, pos_num, neg_num = sums[0], sums[1], sums[2], sums[3]
    # Reference divides by pos+neg unguarded (NaN when everything is ignored).
    sum_num = jnp.maximum(pos_num + neg_num, 1.0)
    wpos = neg_num / sum_num
    wneg = pos_num / sum_num
    total = N * Ce * H * W                             # size_average over ALL elements
    return (wpos * pos_loss + wneg * neg_loss) / total


def joint_edge_seg_loss(seg_in, seg_body_in, edge_in, seg_bord_mask, edgemask,
                        seg_weight=1.0, seg_body_weight=1.0, edge_weight=1.0,
                        att_weight=1.0):
    N, C, H, W = seg_in.shape
    HW = H * W

    segmask = onehot2label(seg_bord_mask)              # (N, H, W) int32, 255 = ignore
    edge_max = jnp.max(edge_in, axis=1)                # (N, H, W)
    att_mask = jnp.where(edge_max > 0.8, segmask, IGNORE_INDEX)

    logits = seg_in.reshape(N, C, HW)                  # free reshape, dtype kept
    seg_lab = segmask.reshape(N, 1, HW).astype(jnp.int32)
    att_lab = att_mask.reshape(N, 1, HW).astype(jnp.int32)

    # One softmax pass over seg_in feeds both seg OHEM and edge-attention OHEM.
    packed = fused_softmax_gather(logits, seg_lab, att_lab)          # (N, 4, HW)
    prob_s = packed[:, 0].reshape(-1)
    nll_s = packed[:, 1].reshape(-1)
    prob_a = packed[:, 2].reshape(-1)
    nll_a = packed[:, 3].reshape(-1)

    seg_loss = _ohem_from_gathered(prob_s, nll_s, seg_lab.reshape(-1), min_kept=10000)
    att_loss = _ohem_from_gathered(prob_a, nll_a, att_lab.reshape(-1), min_kept=5000)

    # TODO(synk): 'val' mode CrossEntropyLoss2d branch and the cfg.REDUCE_BORDER_EPOCH /
    # cfg.BATCH_WEIGHTING config paths are not modeled (train mode, per-image weights).
    losses = {}
    losses["seg_loss"] = seg_weight * seg_loss
    losses["seg_body"] = seg_body_weight * img_wt_loss_soft_nll(seg_body_in, seg_bord_mask)
    losses["edge_loss"] = edge_weight * 20.0 * bce2d(edge_in, edgemask)
    losses["edge_ohem_loss"] = att_weight * att_loss
    return losses


# ----------------------------------------------------------------------------- #
if __name__ == "__main__":
    key = jax.random.PRNGKey(0)
    k1, k2, k3, k4, k5 = jax.random.split(key, 5)

    N, C, H, W = 2, 4, 16, 16                          # 4 seg classes + 1 border channel

    seg_in = jax.random.normal(k1, (N, C, H, W), dtype=jnp.float32)
    seg_body_in = jax.random.normal(k2, (N, C, H, W), dtype=jnp.float32)
    edge_in = jax.random.normal(k3, (N, 1, H, W), dtype=jnp.float32)

    # seg_bord_mask: one-hot over C seg classes + 1 border channel, NCHW float.
    labels = jax.random.randint(k4, (N, H, W), 0, C + 1)
    seg_bord_mask = jnp.transpose(
        jax.nn.one_hot(labels, C + 1, dtype=jnp.float32), (0, 3, 1, 2))
    # edgemask: binary 0/1 edge ground truth.
    edgemask = jax.random.bernoulli(k5, 0.3, (N, 1, H, W)).astype(jnp.float32)

    losses = jax.jit(joint_edge_seg_loss)(seg_in, seg_body_in, edge_in,
                                          seg_bord_mask, edgemask)
    for v in losses.values():
        jax.block_until_ready(v)

    print("KERNEL_OK")
</pallas_src>

<mosaic_0001>
module attributes {stable_mosaic.version = 11 : i64} {
  func.func @kernel(%arg0: i32, %arg1: i32, %arg2: memref<1x4x256xf32, #tpu.memory_space<vmem>>, %arg3: memref<1x1x256xi32, #tpu.memory_space<vmem>>, %arg4: memref<1x1x256xi32, #tpu.memory_space<vmem>>, %arg5: memref<1x4x256xf32, #tpu.memory_space<vmem>>) attributes {dimension_semantics = [#tpu.dimension_semantics<parallel>, #tpu.dimension_semantics<parallel>], iteration_bounds = array<i64: 2, 1>, scalar_prefetch = 0 : i64, scratch_operands = 0 : i64, tpu.core_type = #tpu.core_type<tc>, window_params = [{transform_indices = @transform_0, window_bounds = array<i64: 1, 4, 256>}, {transform_indices = @transform_1, window_bounds = array<i64: 1, 1, 256>}, {transform_indices = @transform_2, window_bounds = array<i64: 1, 1, 256>}, {transform_indices = @transform_3, window_bounds = array<i64: 1, 4, 256>}]} {
    %c0 = arith.constant 0 : index
    %c0_0 = arith.constant 0 : index
    %c0_1 = arith.constant 0 : index
    %0 = vector.load %arg2[%c0, %c0_0, %c0_1] : memref<1x4x256xf32, #tpu.memory_space<vmem>>, vector<1x4x256xf32>
    %1 = vector.shape_cast %0 : vector<1x4x256xf32> to vector<4x256xf32>
    %cst = arith.constant dense<0xFF800000> : vector<256xf32>
    %2 = vector.multi_reduction <maximumf>, %1, %cst [0] : vector<4x256xf32> to vector<256xf32>
    %3 = vector.shape_cast %2 : vector<256xf32> to vector<1x256xf32>
    %4 = vector.broadcast %3 : vector<1x256xf32> to vector<4x256xf32>
    %5 = arith.subf %1, %4 : vector<4x256xf32>
    %6 = math.exp %5 : vector<4x256xf32>
    %cst_2 = arith.constant dense<0.000000e+00> : vector<256xf32>
    %7 = vector.multi_reduction <add>, %6, %cst_2 [0] : vector<4x256xf32> to vector<256xf32>
    %8 = vector.shape_cast %7 : vector<256xf32> to vector<1x256xf32>
    %9 = math.log %8 : vector<1x256xf32>
    %10 = tpu.iota {dimensions = array<i32: 0>} : vector<4x256xi32>
    %c0_3 = arith.constant 0 : index
    %c0_4 = arith.constant 0 : index
    %c0_5 = arith.constant 0 : index
    %11 = vector.load %arg3[%c0_3, %c0_4, %c0_5] : memref<1x1x256xi32, #tpu.memory_space<vmem>>, vector<1x1x256xi32>
    %12 = vector.shape_cast %11 : vector<1x1x256xi32> to vector<1x256xi32>
    %c255_i32 = arith.constant 255 : i32
    %13 = vector.broadcast %c255_i32 : i32 to vector<1x256xi32>
    %14 = arith.cmpi ne, %12, %13 : vector<1x256xi32>
    %c0_i32 = arith.constant 0 : i32
    %15 = vector.broadcast %c0_i32 : i32 to vector<1x256xi32>
    %16 = arith.select %14, %12, %15 : vector<1x256xi1>, vector<1x256xi32>
    %17 = vector.broadcast %16 : vector<1x256xi32> to vector<4x256xi32>
    %18 = arith.cmpi eq, %10, %17 : vector<4x256xi32>
    %19 = arith.extui %18 : vector<4x256xi1> to vector<4x256xi32>
    %20 = arith.sitofp %19 : vector<4x256xi32> to vector<4x256xf32>
    %21 = arith.mulf %1, %20 : vector<4x256xf32>
    %cst_6 = arith.constant dense<0.000000e+00> : vector<256xf32>
    %22 = vector.multi_reduction <add>, %21, %cst_6 [0] : vector<4x256xf32> to vector<256xf32>
    %23 = vector.shape_cast %22 : vector<256xf32> to vector<1x256xf32>
    %24 = arith.subf %23, %3 : vector<1x256xf32>
    %25 = arith.subf %24, %9 : vector<1x256xf32>
    %26 = math.exp %25 : vector<1x256xf32>
    %cst_7 = arith.constant 0.000000e+00 : f32
    %27 = vector.broadcast %cst_7 : f32 to vector<1x256xf32>
    %28 = arith.subf %27, %25 : vector<1x256xf32>
    %c0_8 = arith.constant 0 : index
    %c0_9 = arith.constant 0 : index
    %c0_10 = arith.constant 0 : index
    %29 = vector.load %arg4[%c0_8, %c0_9, %c0_10] : memref<1x1x256xi32, #tpu.memory_space<vmem>>, vector<1x1x256xi32>
    %30 = vector.shape_cast %29 : vector<1x1x256xi32> to vector<1x256xi32>
    %c255_i32_11 = arith.constant 255 : i32
    %31 = vector.broadcast %c255_i32_11 : i32 to vector<1x256xi32>
    %32 = arith.cmpi ne, %30, %31 : vector<1x256xi32>
    %c0_i32_12 = arith.constant 0 : i32
    %33 = vector.broadcast %c0_i32_12 : i32 to vector<1x256xi32>
    %34 = arith.select %32, %30, %33 : vector<1x256xi1>, vector<1x256xi32>
    %35 = vector.broadcast %34 : vector<1x256xi32> to vector<4x256xi32>
    %36 = arith.cmpi eq, %10, %35 : vector<4x256xi32>
    %37 = arith.extui %36 : vector<4x256xi1> to vector<4x256xi32>
    %38 = arith.sitofp %37 : vector<4x256xi32> to vector<4x256xf32>
    %39 = arith.mulf %1, %38 : vector<4x256xf32>
    %cst_13 = arith.constant dense<0.000000e+00> : vector<256xf32>
    %40 = vector.multi_reduction <add>, %39, %cst_13 [0] : vector<4x256xf32> to vector<256xf32>
    %41 = vector.shape_cast %40 : vector<256xf32> to vector<1x256xf32>
    %42 = arith.subf %41, %3 : vector<1x256xf32>
    %43 = arith.subf %42, %9 : vector<1x256xf32>
    %44 = math.exp %43 : vector<1x256xf32>
    %cst_14 = arith.constant 0.000000e+00 : f32
    %45 = vector.broadcast %cst_14 : f32 to vector<1x256xf32>
    %46 = arith.subf %45, %43 : vector<1x256xf32>
    %47 = tpu.iota {dimensions = array<i32: 0>} : vector<4x256xi32>
    %48 = vector.shape_cast %46 : vector<1x256xf32> to vector<1x256xf32>
    %49 = vector.broadcast %48 : vector<1x256xf32> to vector<4x256xf32>
    %c2_i32 = arith.constant 2 : i32
    %50 = vector.broadcast %c2_i32 : i32 to vector<4x256xi32>
    %51 = arith.cmpi eq, %47, %50 : vector<4x256xi32>
    %52 = vector.shape_cast %44 : vector<1x256xf32> to vector<1x256xf32>
    %53 = vector.broadcast %52 : vector<1x256xf32> to vector<4x256xf32>
    %54 = arith.select %51, %53, %49 : vector<4x256xi1>, vector<4x256xf32>
    %c1_i32 = arith.constant 1 : i32
    %55 = vector.broadcast %c1_i32 : i32 to vector<4x256xi32>
    %56 = arith.cmpi eq, %47, %55 : vector<4x256xi32>
    %57 = vector.shape_cast %28 : vector<1x256xf32> to vector<1x256xf32>
    %58 = vector.broadcast %57 : vector<1x256xf32> to vector<4x256xf32>
    %59 = arith.select %56, %58, %54 : vector<4x256xi1>, vector<4x256xf32>
    %c0_i32_15 = arith.constant 0 : i32
    %60 = vector.broadcast %c0_i32_15 : i32 to vector<4x256xi32>
    %61 = arith.cmpi eq, %47, %60 : vector<4x256xi32>
    %62 = vector.shape_cast %26 : vector<1x256xf32> to vector<1x256xf32>
    %63 = vector.broadcast %62 : vector<1x256xf32> to vector<4x256xf32>
    %64 = arith.select %61, %63, %59 : vector<4x256xi1>, vector<4x256xf32>
    %c0_16 = arith.constant 0 : index
    %c0_17 = arith.constant 0 : index
    %c0_18 = arith.constant 0 : index
    %65 = vector.load %arg5[%c0_16, %c0_17, %c0_18] : memref<1x4x256xf32, #tpu.memory_space<vmem>>, vector<1x4x256xf32>
    %66 = vector.shape_cast %65 : vector<1x4x256xf32> to vector<4x256xf32>
    %67 = vector.shape_cast %64 : vector<4x256xf32> to vector<1x4x256xf32>
    tpu.vector_store %arg5[%c0_16, %c0_17, %c0_18], %67 {strides = array<i32>} : memref<1x4x256xf32, #tpu.memory_space<vmem>>, vector<1x4x256xf32>,
    return
  }
  func.func @transform_0(%arg0: i32, %arg1: i32) -> (i32, i32, i32) {
    %c0_i32 = arith.constant 0 : i32
    %c0_i32_0 = arith.constant 0 : i32
    return %arg0, %c0_i32, %arg1 : i32, i32, i32
  }
  func.func @transform_1(%arg0: i32, %arg1: i32) -> (i32, i32, i32) {
    %c0_i32 = arith.constant 0 : i32
    %c0_i32_0 = arith.constant 0 : i32
    return %arg0, %c0_i32, %arg1 : i32, i32, i32
  }
  func.func @transform_2(%arg0: i32, %arg1: i32) -> (i32, i32, i32) {
    %c0_i32 = arith.constant 0 : i32
    %c0_i32_0 = arith.constant 0 : i32
    return %arg0, %c0_i32, %arg1 : i32, i32, i32
  }
  func.func @transform_3(%arg0: i32, %arg1: i32) -> (i32, i32, i32) {
    %c0_i32 = arith.constant 0 : i32
    %c0_i32_0 = arith.constant 0 : i32
    return %arg0, %c0_i32, %arg1 : i32, i32, i32
  }
}

module attributes {stable_mosaic.version = 11 : i64} {
  func.func @kernel(%arg0: i32, %arg1: i32, %arg2: memref<1x16x16xf32, #tpu.memory_space<vmem>>, %arg3: memref<1x16x16xf32, #tpu.memory_space<vmem>>, %arg4: memref<1x4x16xf32, #tpu.memory_space<vmem>>) attributes {dimension_semantics = [#tpu.dimension_semantics<parallel>, #tpu.dimension_semantics<arbitrary>], iteration_bounds = array<i64: 2, 1>, scalar_prefetch = 0 : i64, scratch_operands = 0 : i64, tpu.core_type = #tpu.core_type<tc>, window_params = [{transform_indices = @transform_0, window_bounds = array<i64: 1, 16, 16>}, {transform_indices = @transform_1, window_bounds = array<i64: 1, 16, 16>}, {transform_indices = @transform_2, window_bounds = array<i64: 1, 4, 16>}]} {
    %c0_i32 = arith.constant 0 : i32
    %0 = arith.cmpi eq, %arg1, %c0_i32 : i32
    %1 = arith.extui %0 : i1 to i32
    %c0_i32_0 = arith.constant 0 : i32
    %2 = arith.cmpi ne, %1, %c0_i32_0 : i32
    scf.if %2 {
      %cst_23 = arith.constant 0.000000e+00 : f32
      %67 = vector.broadcast %cst_23 : f32 to vector<4x16xf32>
      %c0_24 = arith.constant 0 : index
      %c0_25 = arith.constant 0 : index
      %c0_26 = arith.constant 0 : index
      %68 = vector.load %arg4[%c0_24, %c0_25, %c0_26] : memref<1x4x16xf32, #tpu.memory_space<vmem>>, vector<1x4x16xf32>
      %69 = vector.shape_cast %68 : vector<1x4x16xf32> to vector<4x16xf32>
      %70 = vector.shape_cast %67 : vector<4x16xf32> to vector<1x4x16xf32>
      tpu.vector_store %arg4[%c0_24, %c0_25, %c0_26], %70 {strides = array<i32>} : memref<1x4x16xf32, #tpu.memory_space<vmem>>, vector<1x4x16xf32>,
    } else {
    }
    %c0 = arith.constant 0 : index
    %c0_1 = arith.constant 0 : index
    %c0_2 = arith.constant 0 : index
    %3 = vector.load %arg2[%c0, %c0_1, %c0_2] : memref<1x16x16xf32, #tpu.memory_space<vmem>>, vector<1x16x16xf32>
    %4 = vector.shape_cast %3 : vector<1x16x16xf32> to vector<16x16xf32>
    %c0_3 = arith.constant 0 : index
    %c0_4 = arith.constant 0 : index
    %c0_5 = arith.constant 0 : index
    %5 = vector.load %arg3[%c0_3, %c0_4, %c0_5] : memref<1x16x16xf32, #tpu.memory_space<vmem>>, vector<1x16x16xf32>
    %6 = vector.shape_cast %5 : vector<1x16x16xf32> to vector<16x16xf32>
    %7 = tpu.iota {dimensions = array<i32: 0>} : vector<16x16xi32>
    %c16_i32 = arith.constant 16 : i32
    %8 = arith.muli %arg1, %c16_i32 : i32
    %9 = vector.broadcast %8 : i32 to vector<16x16xi32>
    %10 = arith.addi %9, %7 : vector<16x16xi32>
    %c16_i32_6 = arith.constant 16 : i32
    %11 = vector.broadcast %c16_i32_6 : i32 to vector<16x16xi32>
    %12 = arith.cmpi slt, %10, %11 : vector<16x16xi32>
    %cst = arith.constant 0.000000e+00 : f32
    %13 = vector.broadcast %cst : f32 to vector<16x16xf32>
    %14 = arith.maximumf %4, %13 : vector<16x16xf32>
    %15 = arith.mulf %4, %6 : vector<16x16xf32>
    %16 = arith.subf %14, %15 : vector<16x16xf32>
    %17 = math.absf %4 : vector<16x16xf32>
    %cst_7 = arith.constant 0.000000e+00 : f32
    %18 = vector.broadcast %cst_7 : f32 to vector<16x16xf32>
    %19 = arith.subf %18, %17 : vector<16x16xf32>
    %20 = math.exp %19 : vector<16x16xf32>
    %21 = math.log1p %20 : vector<16x16xf32>
    %22 = arith.addf %16, %21 : vector<16x16xf32>
    %cst_8 = arith.constant 1.000000e+00 : f32
    %23 = vector.broadcast %cst_8 : f32 to vector<16x16xf32>
    %24 = arith.cmpf oeq, %6, %23 : vector<16x16xf32>
    %25 = arith.andi %12, %24 : vector<16x16xi1>
    %cst_9 = arith.constant 0.000000e+00 : f32
    %26 = vector.broadcast %cst_9 : f32 to vector<16x16xf32>
    %27 = arith.cmpf oeq, %6, %26 : vector<16x16xf32>
    %28 = arith.andi %12, %27 : vector<16x16xi1>
    %cst_10 = arith.constant 0.000000e+00 : f32
    %29 = vector.broadcast %cst_10 : f32 to vector<16x16xf32>
    %cst_11 = arith.constant 1.000000e+00 : f32
    %30 = vector.broadcast %cst_11 : f32 to vector<16x16xf32>
    %c0_12 = arith.constant 0 : index
    %c0_13 = arith.constant 0 : index
    %c0_14 = arith.constant 0 : index
    %31 = vector.load %arg4[%c0_12, %c0_13, %c0_14] : memref<1x4x16xf32, #tpu.memory_space<vmem>>, vector<1x4x16xf32>
    %32 = vector.shape_cast %31 : vector<1x4x16xf32> to vector<4x16xf32>
    %33 = arith.select %25, %22, %29 : vector<16x16xi1>, vector<16x16xf32>
    %cst_15 = arith.constant dense<0.000000e+00> : vector<16xf32>
    %34 = vector.multi_reduction <add>, %33, %cst_15 [0] : vector<16x16xf32> to vector<16xf32>
    %35 = vector.shape_cast %34 : vector<16xf32> to vector<1x16xf32>
    %36 = arith.select %28, %22, %29 : vector<16x16xi1>, vector<16x16xf32>
    %cst_16 = arith.constant dense<0.000000e+00> : vector<16xf32>
    %37 = vector.multi_reduction <add>, %36, %cst_16 [0] : vector<16x16xf32> to vector<16xf32>
    %38 = vector.shape_cast %37 : vector<16xf32> to vector<1x16xf32>
    %39 = arith.select %25, %30, %29 : vector<16x16xi1>, vector<16x16xf32>
    %cst_17 = arith.constant dense<0.000000e+00> : vector<16xf32>
    %40 = vector.multi_reduction <add>, %39, %cst_17 [0] : vector<16x16xf32> to vector<16xf32>
    %41 = vector.shape_cast %40 : vector<16xf32> to vector<1x16xf32>
    %42 = arith.select %28, %30, %29 : vector<16x16xi1>, vector<16x16xf32>
    %cst_18 = arith.constant dense<0.000000e+00> : vector<16xf32>
    %43 = vector.multi_reduction <add>, %42, %cst_18 [0] : vector<16x16xf32> to vector<16xf32>
    %44 = vector.shape_cast %43 : vector<16xf32> to vector<1x16xf32>
    %45 = tpu.iota {dimensions = array<i32: 0>} : vector<4x16xi32>
    %46 = vector.shape_cast %44 : vector<1x16xf32> to vector<1x16xf32>
    %47 = vector.broadcast %46 : vector<1x16xf32> to vector<4x16xf32>
    %c2_i32 = arith.constant 2 : i32
    %48 = vector.broadcast %c2_i32 : i32 to vector<4x16xi32>
    %49 = arith.cmpi eq, %45, %48 : vector<4x16xi32>
    %50 = vector.shape_cast %41 : vector<1x16xf32> to vector<1x16xf32>
    %51 = vector.broadcast %50 : vector<1x16xf32> to vector<4x16xf32>
    %52 = arith.select %49, %51, %47 : vector<4x16xi1>, vector<4x16xf32>
    %c1_i32 = arith.constant 1 : i32
    %53 = vector.broadcast %c1_i32 : i32 to vector<4x16xi32>
    %54 = arith.cmpi eq, %45, %53 : vector<4x16xi32>
    %55 = vector.shape_cast %38 : vector<1x16xf32> to vector<1x16xf32>
    %56 = vector.broadcast %55 : vector<1x16xf32> to vector<4x16xf32>
    %57 = arith.select %54, %56, %52 : vector<4x16xi1>, vector<4x16xf32>
    %c0_i32_19 = arith.constant 0 : i32
    %58 = vector.broadcast %c0_i32_19 : i32 to vector<4x16xi32>
    %59 = arith.cmpi eq, %45, %58 : vector<4x16xi32>
    %60 = vector.shape_cast %35 : vector<1x16xf32> to vector<1x16xf32>
    %61 = vector.broadcast %60 : vector<1x16xf32> to vector<4x16xf32>
    %62 = arith.select %59, %61, %57 : vector<4x16xi1>, vector<4x16xf32>
    %63 = arith.addf %32, %62 : vector<4x16xf32>
    %c0_20 = arith.constant 0 : index
    %c0_21 = arith.constant 0 : index
    %c0_22 = arith.constant 0 : index
    %64 = vector.load %arg4[%c0_20, %c0_21, %c0_22] : memref<1x4x16xf32, #tpu.memory_space<vmem>>, vector<1x4x16xf32>
    %65 = vector.shape_cast %64 : vector<1x4x16xf32> to vector<4x16xf32>
    %66 = vector.shape_cast %63 : vector<4x16xf32> to vector<1x4x16xf32>
    tpu.vector_store %arg4[%c0_20, %c0_21, %c0_22], %66 {strides = array<i32>} : memref<1x4x16xf32, #tpu.memory_space<vmem>>, vector<1x4x16xf32>,
    return
  }
  func.func @transform_0(%arg0: i32, %arg1: i32) -> (i32, i32, i32) {
    %c0_i32 = arith.constant 0 : i32
    %c0_i32_0 = arith.constant 0 : i32
    return %arg0, %arg1, %c0_i32 : i32, i32, i32
  }
  func.func @transform_1(%arg0: i32, %arg1: i32) -> (i32, i32, i32) {
    %c0_i32 = arith.constant 0 : i32
    %c0_i32_0 = arith.constant 0 : i32
    return %arg0, %arg1, %c0_i32 : i32, i32, i32
  }
  func.func @transform_2(%arg0: i32, %arg1: i32) -> (i32, i32, i32) {
    %c0_i32 = arith.constant 0 : i32
    %c0_i32_0 = arith.constant 0 : i32
    %c0_i32_1 = arith.constant 0 : i32
    return %arg0, %c0_i32, %c0_i32_0 : i32, i32, i32
  }
}

module attributes {stable_mosaic.version = 11 : i64} {
  func.func @kernel(%arg0: i32, %arg1: i32, %arg2: memref<1x4x256xf32, #tpu.memory_space<vmem>>, %arg3: memref<1x5x256xf32, #tpu.memory_space<vmem>>, %arg4: memref<1x4x1xf32, #tpu.memory_space<vmem>>, %arg5: memref<1x256xf32, #tpu.memory_space<vmem>>, %arg6: memref<1x1x256xf32, #tpu.memory_space<vmem>>) attributes {dimension_semantics = [#tpu.dimension_semantics<parallel>, #tpu.dimension_semantics<arbitrary>], iteration_bounds = array<i64: 2, 1>, scalar_prefetch = 0 : i64, scratch_operands = 0 : i64, tpu.core_type = #tpu.core_type<tc>, window_params = [{transform_indices = @transform_0, window_bounds = array<i64: 1, 4, 256>}, {transform_indices = @transform_1, window_bounds = array<i64: 1, 5, 256>}, {transform_indices = @transform_2, window_bounds = array<i64: 1, 4, 1>}, {transform_indices = @transform_3, window_bounds = array<i64: 1, 256>}, {transform_indices = @transform_4, window_bounds = array<i64: 1, 1, 256>}]} {
    %c0_i32 = arith.constant 0 : i32
    %0 = arith.cmpi eq, %arg1, %c0_i32 : i32
    %1 = arith.extui %0 : i1 to i32
    %c0_i32_0 = arith.constant 0 : i32
    %2 = arith.cmpi ne, %1, %c0_i32_0 : i32
    scf.if %2 {
      %cst_25 = arith.constant 0.000000e+00 : f32
      %55 = vector.broadcast %cst_25 : f32 to vector<1x256xf32>
      %c0_26 = arith.constant 0 : index
      %c0_27 = arith.constant 0 : index
      %c0_28 = arith.constant 0 : index
      %56 = vector.load %arg6[%c0_26, %c0_27, %c0_28] : memref<1x1x256xf32, #tpu.memory_space<vmem>>, vector<1x1x256xf32>
      %57 = vector.shape_cast %56 : vector<1x1x256xf32> to vector<1x256xf32>
      %58 = vector.shape_cast %55 : vector<1x256xf32> to vector<1x1x256xf32>
      tpu.vector_store %arg6[%c0_26, %c0_27, %c0_28], %58 {strides = array<i32>} : memref<1x1x256xf32, #tpu.memory_space<vmem>>, vector<1x1x256xf32>,
    } else {
    }
    %c0 = arith.constant 0 : index
    %c0_1 = arith.constant 0 : index
    %c0_2 = arith.constant 0 : index
    %3 = vector.load %arg2[%c0, %c0_1, %c0_2] : memref<1x4x256xf32, #tpu.memory_space<vmem>>, vector<1x4x256xf32>
    %4 = vector.shape_cast %3 : vector<1x4x256xf32> to vector<4x256xf32>
    %c0_3 = arith.constant 0 : index
    %c0_4 = arith.constant 0 : index
    %c0_5 = arith.constant 0 : index
    %5 = vector.load %arg3[%c0_3, %c0_4, %c0_5] : memref<1x5x256xf32, #tpu.memory_space<vmem>>, vector<1x4x256xf32>
    %6 = vector.shape_cast %5 : vector<1x4x256xf32> to vector<4x256xf32>
    %c0_6 = arith.constant 0 : index
    %c0_7 = arith.constant 0 : index
    %c0_8 = arith.constant 0 : index
    %7 = vector.load %arg4[%c0_6, %c0_7, %c0_8] : memref<1x4x1xf32, #tpu.memory_space<vmem>>, vector<1x4x1xf32>
    %8 = vector.shape_cast %7 : vector<1x4x1xf32> to vector<4x1xf32>
    %cst = arith.constant dense<0xFF800000> : vector<256xf32>
    %9 = vector.multi_reduction <maximumf>, %4, %cst [0] : vector<4x256xf32> to vector<256xf32>
    %10 = vector.shape_cast %9 : vector<256xf32> to vector<1x256xf32>
    %11 = vector.broadcast %10 : vector<1x256xf32> to vector<4x256xf32>
    %12 = arith.subf %4, %11 : vector<4x256xf32>
    %13 = math.exp %12 : vector<4x256xf32>
    %cst_9 = arith.constant dense<0.000000e+00> : vector<256xf32>
    %14 = vector.multi_reduction <add>, %13, %cst_9 [0] : vector<4x256xf32> to vector<256xf32>
    %15 = vector.shape_cast %14 : vector<256xf32> to vector<1x256xf32>
    %16 = math.log %15 : vector<1x256xf32>
    %17 = arith.mulf %13, %6 : vector<4x256xf32>
    %cst_10 = arith.constant dense<0.000000e+00> : vector<256xf32>
    %18 = vector.multi_reduction <add>, %17, %cst_10 [0] : vector<4x256xf32> to vector<256xf32>
    %19 = vector.shape_cast %18 : vector<256xf32> to vector<1x256xf32>
    %20 = vector.broadcast %10 : vector<1x256xf32> to vector<4x256xf32>
    %21 = arith.subf %4, %20 : vector<4x256xf32>
    %22 = math.log %19 : vector<1x256xf32>
    %23 = vector.broadcast %22 : vector<1x256xf32> to vector<4x256xf32>
    %24 = arith.maximumf %21, %23 : vector<4x256xf32>
    %25 = vector.broadcast %16 : vector<1x256xf32> to vector<4x256xf32>
    %26 = arith.subf %24, %25 : vector<4x256xf32>
    %27 = vector.broadcast %8 : vector<4x1xf32> to vector<4x256xf32>
    %28 = arith.mulf %6, %27 : vector<4x256xf32>
    %29 = arith.mulf %28, %26 : vector<4x256xf32>
    %cst_11 = arith.constant dense<0.000000e+00> : vector<256xf32>
    %30 = vector.multi_reduction <add>, %29, %cst_11 [0] : vector<4x256xf32> to vector<256xf32>
    %31 = vector.shape_cast %30 : vector<256xf32> to vector<1x256xf32>
    %cst_12 = arith.constant dense<0.000000e+00> : vector<256xf32>
    %32 = vector.multi_reduction <add>, %6, %cst_12 [0] : vector<4x256xf32> to vector<256xf32>
    %33 = vector.shape_cast %32 : vector<256xf32> to vector<1x256xf32>
    %cst_13 = arith.constant 0.000000e+00 : f32
    %34 = vector.broadcast %cst_13 : f32 to vector<1x256xf32>
    %35 = arith.cmpf ogt, %33, %34 : vector<1x256xf32>
    %36 = tpu.iota {dimensions = array<i32: 1>} : vector<1x256xi32>
    %c256_i32 = arith.constant 256 : i32
    %37 = arith.muli %arg1, %c256_i32 : i32
    %38 = vector.broadcast %37 : i32 to vector<1x256xi32>
    %39 = arith.addi %38, %36 : vector<1x256xi32>
    %c256_i32_14 = arith.constant 256 : i32
    %40 = vector.broadcast %c256_i32_14 : i32 to vector<1x256xi32>
    %41 = arith.cmpi slt, %39, %40 : vector<1x256xi32>
    %c0_15 = arith.constant 0 : index
    %c0_16 = arith.constant 0 : index
    %42 = vector.load %arg5[%c0_15, %c0_16] : memref<1x256xf32, #tpu.memory_space<vmem>>, vector<1x256xf32>
    %cst_17 = arith.constant 0.000000e+00 : f32
    %43 = vector.broadcast %cst_17 : f32 to vector<1x256xf32>
    %44 = arith.subf %43, %42 : vector<1x256xf32>
    %45 = arith.mulf %44, %31 : vector<1x256xf32>
    %c0_18 = arith.constant 0 : index
    %c0_19 = arith.constant 0 : index
    %c0_20 = arith.constant 0 : index
    %46 = vector.load %arg6[%c0_18, %c0_19, %c0_20] : memref<1x1x256xf32, #tpu.memory_space<vmem>>, vector<1x1x256xf32>
    %47 = vector.shape_cast %46 : vector<1x1x256xf32> to vector<1x256xf32>
    %48 = arith.andi %35, %41 : vector<1x256xi1>
    %cst_21 = arith.constant 0.000000e+00 : f32
    %49 = vector.broadcast %cst_21 : f32 to vector<1x256xf32>
    %50 = arith.select %48, %45, %49 : vector<1x256xi1>, vector<1x256xf32>
    %51 = arith.addf %47, %50 : vector<1x256xf32>
    %c0_22 = arith.constant 0 : index
    %c0_23 = arith.constant 0 : index
    %c0_24 = arith.constant 0 : index
    %52 = vector.load %arg6[%c0_22, %c0_23, %c0_24] : memref<1x1x256xf32, #tpu.memory_space<vmem>>, vector<1x1x256xf32>
    %53 = vector.shape_cast %52 : vector<1x1x256xf32> to vector<1x256xf32>
    %54 = vector.shape_cast %51 : vector<1x256xf32> to vector<1x1x256xf32>
    tpu.vector_store %arg6[%c0_22, %c0_23, %c0_24], %54 {strides = array<i32>} : memref<1x1x256xf32, #tpu.memory_space<vmem>>, vector<1x1x256xf32>,
    return
  }
  func.func @transform_0(%arg0: i32, %arg1: i32) -> (i32, i32, i32) {
    %c0_i32 = arith.constant 0 : i32
    %c0_i32_0 = arith.constant 0 : i32
    return %arg0, %c0_i32, %arg1 : i32, i32, i32
  }
  func.func @transform_1(%arg0: i32, %arg1: i32) -> (i32, i32, i32) {
    %c0_i32 = arith.constant 0 : i32
    %c0_i32_0 = arith.constant 0 : i32
    return %arg0, %c0_i32, %arg1 : i32, i32, i32
  }
  func.func @transform_2(%arg0: i32, %arg1: i32) -> (i32, i32, i32) {
    %c0_i32 = arith.constant 0 : i32
    %c0_i32_0 = arith.constant 0 : i32
    %c0_i32_1 = arith.constant 0 : i32
    return %arg0, %c0_i32, %c0_i32_0 : i32, i32, i32
  }
  func.func @transform_3(%arg0: i32, %arg1: i32) -> (i32, i32) {
    %c0_i32 = arith.constant 0 : i32
    %c0_i32_0 = arith.constant 0 : i32
    return %c0_i32, %arg1 : i32, i32
  }
  func.func @transform_4(%arg0: i32, %arg1: i32) -> (i32, i32, i32) {
    %c0_i32 = arith.constant 0 : i32
    %c0_i32_0 = arith.constant 0 : i32
    %c0_i32_1 = arith.constant 0 : i32
    return %arg0, %c0_i32, %c0_i32_0 : i32, i32, i32
  }
}

</mosaic_0001>

<llo_original>
// kernel: joint_edge_seg_loss.3
$region0: #{joint_edge_seg_loss.3}
  #allocation0 [shape = 'u32[]', space=smem, size = 0x4, offset = 0x4, fixed_abs, tag = 'smem constant byte address 0x4 - core index']
  #allocation1 [shape = 'u32[72,128]{1,0:T(1,128)}', space=vmem, size = 0x9000, scoped, tag = 'internal scratch']
  %s0 = inlined_call_operand.vmem [shape: f32[2,4,256], index: 0, kind: input, shape index: {}]
  %s1 = inlined_call_operand.vmem [shape: s32[2,1,256], index: 1, kind: input, shape index: {}]
  %s2 = inlined_call_operand.vmem [shape: s32[2,1,256], index: 2, kind: input, shape index: {}]
  %s3 = inlined_call_operand.vmem [shape: f32[2,4,256], index: 3, kind: output, shape index: {}]
  %s4 = sld [smem:[#allocation0]]
  $region45: #{joint_edge_seg_loss.3} parent=0
    _
  %s6 = ssub.s32 1, %s4
  %s7 = scalar_select 0, %s6, %s4
  loop: start=0, step=1, limit=4
  $region2: #{joint_edge_seg_loss.3} parent=0 // loop_pre_header
    _
  $region3: #{joint_edge_seg_loss.3} parent=0 // loop_header
    %s9 = sphi 0, %s13
    %p10 = scmp.ge.s32.totalorder %s9, 4
    %s16 = sphi 0, %s28
    %s17 = sphi 0, %s24
    %s18 = sphi 0, %s16
    %s19 = sphi 0, %s17
    %s20 = sphi 0, %s18
    %s21 = sphi 0, %s19
    %s33 = sphi 0, %s35
    %s36 = sphi 0, %s33
    %s37 = sphi 0, %s36
    %s53 = sphi 0, %s37
    %s61 = sphi 0, %s63
    %s64 = sphi 0, %s61
    %s65 = sphi 0, %s64
    %s81 = sphi 0, %s65
    %s89 = sphi 0, %s91
    %s92 = sphi 0, %s89
    %s93 = sphi 0, %s92
    %s109 = sphi 0, %s93
    %s117 = sphi 0, %s119
    %s120 = sphi 0, %s117
    %s121 = sphi 0, %s120
    %s137 = sphi 0, %s121
  $region4: #{joint_edge_seg_loss.3} parent=0 // loop_header_branch
    %12 = sbr.rel (%p10) target = $region8
  $region5: #{joint_edge_seg_loss.3} parent=0 // loop_body
    %s14 = ssub.s32 %s9, 1
    %s15 = ssub.s32 %s9, 2
    %s22 = sadd.s32 1, %s17
    %p23 = scmp.ge.s32.totalorder %s22, 1
    %s24 = scalar_select %p23, 0, %s22
    %s25 = sadd.s32 1, %s16
    %s26 = scalar_select %p23, %s25, %s16
    %p27 = scmp.ge.s32.totalorder %s26, 2
    %s28 = scalar_select %p27, 0, %s26
    %s29 = ssub.s32 %s16, %s28
    %s30 = ssub.s32 %s17, %s24
    %s31 = sor.u32 %s29, %s30
    %p32 = scmp.eq.s32.totalorder %s31, 0
    %s34 = sadd.s32 %s33, 1
    %s35 = scalar_select %p32, %s33, %s34
    %p38 = pneg %p32
    %p39 = scmp.eq.s32.totalorder %s9, 1
    %p40 = por %p38, %p39
    %p41 = scmp.ne.s32.totalorder %s33, %s36
    %p42 = scmp.eq.s32.totalorder %s9, 0
    %p43 = por %p41, %p42
    %p44 = scmp.ne.s32.totalorder %s33, %s36
    %p45 = scmp.eq.s32.totalorder %s14, 1
    %p46 = por %p44, %p45
    %p47 = scmp.ne.s32.totalorder %s36, %s37
    %p48 = scmp.eq.s32.totalorder %s14, 0
    %p49 = por %p47, %p48
    %p50 = scmp.ne.s32.totalorder %s36, %s37
    %p51 = scmp.eq.s32.totalorder %s15, 1
    %p52 = por %p50, %p51
    %p54 = scmp.ne.s32.totalorder %s37, %s53
    %p55 = scmp.eq.s32.totalorder %s15, 0
    %p56 = por %p54, %p55
    %s57 = ssub.s32 %s16, %s28
    %s58 = ssub.s32 %s17, %s24
    %s59 = sor.u32 %s57, %s58
    %p60 = scmp.eq.s32.totalorder %s59, 0
    %s62 = sadd.s32 %s61, 1
    %s63 = scalar_select %p60, %s61, %s62
    %p66 = pneg %p60
    %p67 = scmp.eq.s32.totalorder %s9, 1
    %p68 = por %p66, %p67
    %p69 = scmp.ne.s32.totalorder %s61, %s64
    %p70 = scmp.eq.s32.totalorder %s9, 0
    %p71 = por %p69, %p70
    %p72 = scmp.ne.s32.totalorder %s61, %s64
    %p73 = scmp.eq.s32.totalorder %s14, 1
    %p74 = por %p72, %p73
    %p75 = scmp.ne.s32.totalorder %s64, %s65
    %p76 = scmp.eq.s32.totalorder %s14, 0
    %p77 = por %p75, %p76
    %p78 = scmp.ne.s32.totalorder %s64, %s65
    %p79 = scmp.eq.s32.totalorder %s15, 1
    %p80 = por %p78, %p79
    %p82 = scmp.ne.s32.totalorder %s65, %s81
    %p83 = scmp.eq.s32.totalorder %s15, 0
    %p84 = por %p82, %p83
    %s85 = ssub.s32 %s16, %s28
    %s86 = ssub.s32 %s17, %s24
    %s87 = sor.u32 %s85, %s86
    %p88 = scmp.eq.s32.totalorder %s87, 0
    %s90 = sadd.s32 %s89, 1
    %s91 = scalar_select %p88, %s89, %s90
    %p94 = pneg %p88
    %p95 = scmp.eq.s32.totalorder %s9, 1
    %p96 = por %p94, %p95
    %p97 = scmp.ne.s32.totalorder %s89, %s92
    %p98 = scmp.eq.s32.totalorder %s9, 0
    %p99 = por %p97, %p98
    %p100 = scmp.ne.s32.totalorder %s89, %s92
    %p101 = scmp.eq.s32.totalorder %s14, 1
    %p102 = por %p100, %p101
    %p103 = scmp.ne.s32.totalorder %s92, %s93
    %p104 = scmp.eq.s32.totalorder %s14, 0
    %p105 = por %p103, %p104
    %p106 = scmp.ne.s32.totalorder %s92, %s93
    %p107 = scmp.eq.s32.totalorder %s15, 1
    %p108 = por %p106, %p107
    %p110 = scmp.ne.s32.totalorder %s93, %s109
    %p111 = scmp.eq.s32.totalorder %s15, 0
    %p112 = por %p110, %p111
    %s113 = ssub.s32 %s16, %s28
    %s114 = ssub.s32 %s17, %s24
    %s115 = sor.u32 %s113, %s114
    %p116 = scmp.eq.s32.totalorder %s115, 0
    %s118 = sadd.s32 %s117, 1
    %s119 = scalar_select %p116, %s117, %s118
    %p122 = pneg %p116
    %p123 = scmp.eq.s32.totalorder %s9, 1
    %p124 = por %p122, %p123
    %p125 = scmp.ne.s32.totalorder %s117, %s120
    %p126 = scmp.eq.s32.totalorder %s9, 0
    %p127 = por %p125, %p126
    %p128 = scmp.ne.s32.totalorder %s117, %s120
    %p129 = scmp.eq.s32.totalorder %s14, 1
    %p130 = por %p128, %p129
    %p131 = scmp.ne.s32.totalorder %s120, %s121
    %p132 = scmp.eq.s32.totalorder %s14, 0
    %p133 = por %p131, %p132
    %p134 = scmp.ne.s32.totalorder %s120, %s121
    %p135 = scmp.eq.s32.totalorder %s15, 1
    %p136 = por %p134, %p135
    %p138 = scmp.ne.s32.totalorder %s121, %s137
    %p139 = scmp.eq.s32.totalorder %s15, 0
    %p140 = por %p138, %p139
    %p141 = scmp.le.s32.totalorder 1, %s9
    %p142 = scmp.lt.s32.totalorder %s9, 3
    %p143 = pnand %p141, %p142
    %p144 = pneg %p143
    // Predicated region
    $region9: #{joint_edge_seg_loss.3} parent=5 // pred_check
      _
    $region10: #{joint_edge_seg_loss.3} parent=5 // pred_check_branch
      %146 = sbr.rel (%p143) target = $region12
    $region11: #{joint_edge_seg_loss.3} parent=5 // pred_region
      %s147 = ssub.s32 %s9, 1
    $region12: #{joint_edge_seg_loss.3} parent=5 // pred_fallthru
      _
    %p148 = scmp.lt.s32.totalorder %s9, 2
    // Predicated region
    $region13: #{joint_edge_seg_loss.3} parent=5 // pred_check
      %p149 = pneg %p148
    $region14: #{joint_edge_seg_loss.3} parent=5 // pred_check_branch
      %151 = sbr.rel (%p149) target = $region16
    $region15: #{joint_edge_seg_loss.3} parent=5 // pred_region
      // Predicated region
      $region17: #{joint_edge_seg_loss.3} parent=15 // pred_check
        %p152 = pneg %p43
      $region18: #{joint_edge_seg_loss.3} parent=15 // pred_check_branch
        %154 = sbr.rel (%p152) target = $region20
      $region19: #{joint_edge_seg_loss.3} parent=15 // pred_region
        %s155 = smul.u32 2, %s17
        %p156 = scmp.lt.s32.totalorder %s16, 1
        %s157 = scalar_select %p156, %s16, 1
        %p158 = scmp.lt.s32.totalorder %s155, 1
        %s159 = scalar_select %p158, %s155, 1
        %s160 = smul.addr %s157, 2
        %s161 = sadd.s32 %s159, %s160
        %s162 = smul.addr %s161, 4
        %s163 = scalar_lea.vmem %s0, %s162
        %s164 = smul.u32 2, %s17
      $region20: #{joint_edge_seg_loss.3} parent=15 // pred_fallthru
        _
      // Predicated region
      $region21: #{joint_edge_seg_loss.3} parent=15 // pred_check
        %p165 = pneg %p71
      $region22: #{joint_edge_seg_loss.3} parent=15 // pred_check_branch
        %167 = sbr.rel (%p165) target = $region24
      $region23: #{joint_edge_seg_loss.3} parent=15 // pred_region
        %s168 = smul.u32 2, %s17
        %p169 = scmp.lt.s32.totalorder %s16, 1
        %s170 = scalar_select %p169, %s16, 1
        %p171 = scmp.lt.s32.totalorder %s168, 1
        %s172 = scalar_select %p171, %s168, 1
        %s173 = smul.addr %s170, 2
        %s174 = sadd.s32 %s172, %s173
        %s175 = scalar_lea.vmem %s1, %s174
        %s176 = smul.u32 2, %s17
      $region24: #{joint_edge_seg_loss.3} parent=15 // pred_fallthru
        _
      // Predicated region
      $region25: #{joint_edge_seg_loss.3} parent=15 // pred_check
        %p177 = pneg %p99
      $region26: #{joint_edge_seg_loss.3} parent=15 // pred_check_branch
        %179 = sbr.rel (%p177) target = $region28
      $region27: #{joint_edge_seg_loss.3} parent=15 // pred_region
        %s180 = smul.u32 2, %s17
        %p181 = scmp.lt.s32.totalorder %s16, 1
        %s182 = scalar_select %p181, %s16, 1
        %p183 = scmp.lt.s32.totalorder %s180, 1
        %s184 = scalar_select %p183, %s180, 1
        %s185 = smul.addr %s182, 2
        %s186 = sadd.s32 %s184, %s185
        %s187 = scalar_lea.vmem %s2, %s186
        %s188 = smul.u32 2, %s17
      $region28: #{joint_edge_seg_loss.3} parent=15 // pred_fallthru
        _
    $region16: #{joint_edge_seg_loss.3} parent=5 // pred_fallthru
      _
    %p189 = scmp.le.s32.totalorder 1, %s9
    %p190 = scmp.lt.s32.totalorder %s9, 3
    %p191 = pnand %p189, %p190
    %p192 = pneg %p191
    // Predicated region
    $region29: #{joint_edge_seg_loss.3} parent=5 // pred_check
      _
    $region30: #{joint_edge_seg_loss.3} parent=5 // pred_check_branch
      %194 = sbr.rel (%p191) target = $region32
    $region31: #{joint_edge_seg_loss.3} parent=5 // pred_region
      %s195 = ssub.s32 %s9, 1
      %s196 = smul.u32 2, %s19
      %p197 = scmp.lt.s32.totalorder %s18, 1
      %s198 = scalar_select %p197, %s18, 1
      %p199 = scmp.lt.s32.totalorder %s196, 1
      %s200 = scalar_select %p199, %s196, 1
      %s201 = smul.addr %s198, 2
      %s202 = sadd.s32 %s200, %s201
      %s203 = smul.addr %s202, 4
      %s204 = scalar_lea.vmem %s0, %s203
      %p205 = pneg %p49
      %p206 = pneg %p46
      %s207 = smul.u32 2, %s19
      %p208 = scmp.lt.s32.totalorder %s18, 1
      %s209 = scalar_select %p208, %s18, 1
      %p210 = scmp.lt.s32.totalorder %s207, 1
      %s211 = scalar_select %p210, %s207, 1
      %s212 = smul.addr %s209, 2
      %s213 = sadd.s32 %s211, %s212
      %s214 = scalar_lea.vmem %s1, %s213
      %p215 = pneg %p77
      %p216 = pneg %p74
      %s217 = smul.u32 2, %s19
      %p218 = scmp.lt.s32.totalorder %s18, 1
      %s219 = scalar_select %p218, %s18, 1
      %p220 = scmp.lt.s32.totalorder %s217, 1
      %s221 = scalar_select %p220, %s217, 1
      %s222 = smul.addr %s219, 2
      %s223 = sadd.s32 %s221, %s222
      %s224 = scalar_lea.vmem %s2, %s223
      %p225 = pneg %p105
      %p226 = pneg %p102
      %p227 = pneg %p133
      %p228 = pneg %p130
      %s229 = smul.u32 2, %s19
      %p230 = scmp.lt.s32.totalorder %s18, 1
      %s231 = scalar_select %p230, %s18, 1
      %p232 = scmp.lt.s32.totalorder %s229, 1
      %s233 = scalar_select %p232, %s229, 1
      %s234 = smul.addr %s231, 2
      %s235 = sadd.s32 %s233, %s234
      %s236 = smul.addr %s235, 4
      %s237 = scalar_lea.vmem %s3, %s236
      %s238 = smul.u32 2, %s19
      %p239 = scmp.lt.s32.totalorder %s18, 1
      %s240 = scalar_select %p239, %s18, 1
      %p241 = scmp.lt.s32.totalorder %s238, 1
      %s242 = scalar_select %p241, %s238, 1
      %s243 = smul.addr %s240, 2
      %s244 = sadd.s32 %s242, %s243
      %s245 = smul.addr %s244, 4
      %s246 = scalar_lea.vmem %s0, %s245
      %s247 = smul.u32 2, %s19
      %s248 = smul.u32 2, %s19
      %p249 = scmp.lt.s32.totalorder %s18, 1
      %s250 = scalar_select %p249, %s18, 1
      %p251 = scmp.lt.s32.totalorder %s248, 1
      %s252 = scalar_select %p251, %s248, 1
      %s253 = smul.addr %s250, 2
      %s254 = sadd.s32 %s252, %s253
      %s255 = scalar_lea.vmem %s1, %s254
      %s256 = smul.u32 2, %s19
      %s257 = smul.u32 2, %s19
      %p258 = scmp.lt.s32.totalorder %s18, 1
      %s259 = scalar_select %p258, %s18, 1
      %p260 = scmp.lt.s32.totalorder %s257, 1
      %s261 = scalar_select %p260, %s257, 1
      %s262 = smul.addr %s259, 2
      %s263 = sadd.s32 %s261, %s262
      %s264 = scalar_lea.vmem %s2, %s263
      %s265 = smul.u32 2, %s19
      %s266 = smul.u32 2, %s19
      %p267 = scmp.lt.s32.totalorder %s18, 1
      %s268 = scalar_select %p267, %s18, 1
      %p269 = scmp.lt.s32.totalorder %s266, 1
      %s270 = scalar_select %p269, %s266, 1
      %s271 = smul.addr %s268, 2
      %s272 = sadd.s32 %s270, %s271
      %s273 = smul.addr %s272, 4
      %s274 = scalar_lea.vmem %s3, %s273
      %s275 = smul.u32 2, %s19
      %v276 = vld [vmem:[%s246] sm:$0xff]
      %278 = vst [vmem:[#allocation1] ss:$2 sm:$0xff] %v276
      %v279 = vld.sshfl [vmem:[#allocation1] sm:$0xff pattern:$0x75316420]
      %v280 = vld.sshfl [vmem:[#allocation1 + $0x8] sm:$0xff pattern:$0x75316420]
      %vm283 = vcmask 1043456
      %v284 = vsel %vm283, %v279, -inf
      %v285 = vrot.slane %v284, 4
      %v286 = vmax.f32 %v284, %v285
      %v287 = vrot.slane %v286, 2
      %v288 = vmax.f32 %v286, %v287
      %v289 = vrot.slane %v288, 1
      %v290 = vmax.f32 %v288, %v289
      %v291 = vsel %vm283, %v280, -inf
      %v292 = vrot.slane %v291, 4
      %v293 = vmax.f32 %v291, %v292
      %v294 = vrot.slane %v293, 2
      %v295 = vmax.f32 %v293, %v294
      %v296 = vrot.slane %v295, 1
      %v297 = vmax.f32 %v295, %v296
      %v300 = vrot.slane %v297, 4
      %v301 = vsel %vm283, %v290, %v300
      %v303 = vsub.f32 %v276, %v301
      %v304 = vmul.f32 %v303, 1.442695
      %v305 = vpow.pop %v304
      %307 = vst [vmem:[#allocation1] ss:$2 sm:$0xff] %v305
      %v308 = vld.sshfl [vmem:[#allocation1] sm:$0xff pattern:$0x75316420]
      %v309 = vld.sshfl [vmem:[#allocation1 + $0x8] sm:$0xff pattern:$0x75316420]
      %v312 = vsel %vm283, %v308, 0.0
      %v313 = vrot.slane %v312, 4
      %v314 = vadd.f32 %v312, %v313
      %v315 = vrot.slane %v314, 2
      %v316 = vadd.f32 %v314, %v315
      %v317 = vrot.slane %v316, 1
      %v318 = vadd.f32 %v316, %v317
      %v319 = vsel %vm283, %v309, 0.0
      %v320 = vrot.slane %v319, 4
      %v321 = vadd.f32 %v319, %v320
      %v322 = vrot.slane %v321, 2
      %v323 = vadd.f32 %v321, %v322
      %v324 = vrot.slane %v323, 1
      %v325 = vadd.f32 %v323, %v324
      %v326 = vlog2.pop %v318
      %v327 = vmul.f32 %v326, 0.6931472
      %v328 = vlog2.pop %v325
      %v329 = vmul.f32 %v328, 0.6931472
      %v330 = vlaneseq
      %v331 = vshrl.u32 %v330, 7
      %v332 = vld [vmem:[%s255] sm:$0x3]
      %vm333 = vcmp.ne.s32.totalorder %v332, 255
      %v334 = vsel %vm333, %v332, 0
      %v335 = vperm.slane %v334, 0
      %v336 = vperm.slane %v334, 1
      %vm337 = vcmp.eq.s32.totalorder %v331, %v335
      %vm338 = vcmp.eq.s32.totalorder %v331, %v336
      %v339 = vsel %vm337, 1, 0
      %v340 = vsel %vm338, 1, 0
      %v341 = vcvt.s32.f32 %v339
      %v342 = vcvt.s32.f32 %v340
      %v345 = vrot.slane %v342, 4
      %v346 = vsel %vm283, %v341, %v345
      %v348 = vmul.f32 %v276, %v346
      %350 = vst [vmem:[#allocation1] ss:$2 sm:$0xff] %v348
      %v351 = vld.sshfl [vmem:[#allocation1] sm:$0xff pattern:$0x75316420]
      %v352 = vld.sshfl [vmem:[#allocation1 + $0x8] sm:$0xff pattern:$0x75316420]
      %v355 = vsel %vm283, %v351, 0.0
      %v356 = vrot.slane %v355, 4
      %v357 = vadd.f32 %v355, %v356
      %v358 = vrot.slane %v357, 2
      %v359 = vadd.f32 %v357, %v358
      %v360 = vrot.slane %v359, 1
      %v361 = vadd.f32 %v359, %v360
      %v362 = vsel %vm283, %v352, 0.0
      %v363 = vrot.slane %v362, 4
      %v364 = vadd.f32 %v362, %v363
      %v365 = vrot.slane %v364, 2
      %v366 = vadd.f32 %v364, %v365
      %v367 = vrot.slane %v366, 1
      %v368 = vadd.f32 %v366, %v367
      %v369 = vsub.f32 %v361, %v290
      %v370 = vsub.f32 %v368, %v297
      %v371 = vsub.f32 %v369, %v327
      %v372 = vsub.f32 %v370, %v329
      %v373 = vmul.f32 %v371, 1.442695
      %v374 = vpow.pop %v373
      %v375 = vmul.f32 %v372, 1.442695
      %v376 = vpow.pop %v375
      %v377 = vsub.f32 0.0, %v371
      %v378 = vsub.f32 0.0, %v372
      %v379 = vld [vmem:[%s264] sm:$0x3]
      %vm380 = vcmp.ne.s32.totalorder %v379, 255
      %v381 = vsel %vm380, %v379, 0
      %v382 = vperm.slane %v381, 0
      %v383 = vperm.slane %v381, 1
      %vm384 = vcmp.eq.s32.totalorder %v331, %v382
      %vm385 = vcmp.eq.s32.totalorder %v331, %v383
      %v386 = vsel %vm384, 1, 0
      %v387 = vsel %vm385, 1, 0
      %v388 = vcvt.s32.f32 %v386
      %v389 = vcvt.s32.f32 %v387
      %v392 = vrot.slane %v389, 4
      %v393 = vsel %vm283, %v388, %v392
      %v395 = vmul.f32 %v276, %v393
      %397 = vst [vmem:[#allocation1] ss:$2 sm:$0xff] %v395
      %v398 = vld.sshfl [vmem:[#allocation1] sm:$0xff pattern:$0x75316420]
      %v399 = vld.sshfl [vmem:[#allocation1 + $0x8] sm:$0xff pattern:$0x75316420]
      %v402 = vsel %vm283, %v398, 0.0
      %v403 = vrot.slane %v402, 4
      %v404 = vadd.f32 %v402, %v403
      %v405 = vrot.slane %v404, 2
      %v406 = vadd.f32 %v404, %v405
      %v407 = vrot.slane %v406, 1
      %v408 = vadd.f32 %v406, %v407
      %v409 = vsel %vm283, %v399, 0.0
      %v410 = vrot.slane %v409, 4
      %v411 = vadd.f32 %v409, %v410
      %v412 = vrot.slane %v411, 2
      %v413 = vadd.f32 %v411, %v412
      %v414 = vrot.slane %v413, 1
      %v415 = vadd.f32 %v413, %v414
      %v416 = vsub.f32 %v408, %v290
      %v417 = vsub.f32 %v415, %v297
      %v418 = vsub.f32 %v416, %v327
      %v419 = vsub.f32 %v417, %v329
      %v420 = vmul.f32 %v418, 1.442695
      %v421 = vpow.pop %v420
      %v422 = vmul.f32 %v419, 1.442695
      %v423 = vpow.pop %v422
      %v424 = vsub.f32 0.0, %v418
      %v425 = vsub.f32 0.0, %v419
      %vm426 = vcmp.eq.s32.totalorder %v331, 2
      %v427 = vsel %vm426, %v421, %v424
      %v428 = vsel %vm426, %v423, %v425
      %vm429 = vcmp.eq.s32.totalorder %v331, 1
      %v430 = vsel %vm429, %v377, %v427
      %v431 = vsel %vm429, %v378, %v428
      %vm432 = vcmp.eq.s32.totalorder %v331, 0
      %v433 = vsel %vm432, %v374, %v430
      %v434 = vsel %vm432, %v376, %v431
      %v437 = vrot.slane %v434, 4
      %v438 = vsel %vm283, %v433, %v437
      %440 = vst [vmem:[%s274] sm:$0xff] %v438
      %s441 = smul.u32 2, %s19
      %p442 = scmp.lt.s32.totalorder %s18, 1
      %s443 = scalar_select %p442, %s18, 1
      %p444 = scmp.lt.s32.totalorder %s441, 1
      %s445 = scalar_select %p444, %s441, 1
      %s446 = smul.addr %s443, 2
      %s447 = sadd.s32 %s445, %s446
      %s448 = smul.addr %s447, 4
      %s449 = scalar_lea.vmem %s3, %s448
      // Predicated region
      $region33: #{joint_edge_seg_loss.3} parent=31 // pred_check
        %p450 = pneg %p130
      $region34: #{joint_edge_seg_loss.3} parent=31 // pred_check_branch
        %452 = sbr.rel (%p450) target = $region36
      $region35: #{joint_edge_seg_loss.3} parent=31 // pred_region
        %s453 = smul.u32 2, %s19
      $region36: #{joint_edge_seg_loss.3} parent=31 // pred_fallthru
        _
    $region32: #{joint_edge_seg_loss.3} parent=5 // pred_fallthru
      _
    %p454 = scmp.le.s32.totalorder 2, %s9
    // Predicated region
    $region37: #{joint_edge_seg_loss.3} parent=5 // pred_check
      %p455 = pneg %p454
    $region38: #{joint_edge_seg_loss.3} parent=5 // pred_check_branch
      %457 = sbr.rel (%p455) target = $region40
    $region39: #{joint_edge_seg_loss.3} parent=5 // pred_region
      %s458 = ssub.s32 %s9, 2
      // Predicated region
      $region41: #{joint_edge_seg_loss.3} parent=39 // pred_check
        %p459 = pneg %p136
      $region42: #{joint_edge_seg_loss.3} parent=39 // pred_check_branch
        %461 = sbr.rel (%p459) target = $region44
      $region43: #{joint_edge_seg_loss.3} parent=39 // pred_region
        %s462 = smul.u32 2, %s21
        %p463 = scmp.lt.s32.totalorder %s20, 1
        %s464 = scalar_select %p463, %s20, 1
        %p465 = scmp.lt.s32.totalorder %s462, 1
        %s466 = scalar_select %p465, %s462, 1
        %s467 = smul.addr %s464, 2
        %s468 = sadd.s32 %s466, %s467
        %s469 = smul.addr %s468, 4
        %s470 = scalar_lea.vmem %s3, %s469
      $region44: #{joint_edge_seg_loss.3} parent=39 // pred_fallthru
        _
    $region40: #{joint_edge_seg_loss.3} parent=5 // pred_fallthru
      _
  $region6: #{joint_edge_seg_loss.3} parent=0 // loop_footer
    %s13 = sadd.s32 1, %s9
  $region7: #{joint_edge_seg_loss.3} parent=0 // loop_footer_branch
    %8 = sbr.rel target = $region3
  $region8: #{joint_edge_seg_loss.3} parent=0 // loop_exit
    _

// kernel: joint_edge_seg_loss.5
$region0: #{joint_edge_seg_loss.5}
  #allocation0 [shape = 'u32[]', space=smem, size = 0x4, offset = 0x4, fixed_abs, tag = 'smem constant byte address 0x4 - core index']
  #allocation1 [shape = 'u32[72,128]{1,0:T(1,128)}', space=vmem, size = 0x9000, scoped, tag = 'internal scratch']
  %s0 = inlined_call_operand.vmem [shape: f32[2,16,16], index: 0, kind: input, shape index: {}]
  %s1 = inlined_call_operand.vmem [shape: f32[2,16,16], index: 1, kind: input, shape index: {}]
  %s2 = inlined_call_operand.vmem [shape: f32[2,4,16], index: 2, kind: output, shape index: {}]
  %s3 = sld [smem:[#allocation0]]
  $region45: #{joint_edge_seg_loss.5} parent=0
    _
  %s5 = ssub.s32 1, %s3
  %s6 = scalar_select 0, %s5, %s3
  loop: start=0, step=1, limit=4
  $region2: #{joint_edge_seg_loss.5} parent=0 // loop_pre_header
    _
  $region3: #{joint_edge_seg_loss.5} parent=0 // loop_header
    %s8 = sphi 0, %s12
    %p9 = scmp.ge.s32.totalorder %s8, 4
    %s15 = sphi 0, %s27
    %s16 = sphi 0, %s23
    %s17 = sphi 0, %s15
    %s18 = sphi 0, %s16
    %s19 = sphi 0, %s17
    %s20 = sphi 0, %s18
    %s32 = sphi 0, %s34
    %s35 = sphi 0, %s32
    %s36 = sphi 0, %s35
    %s52 = sphi 0, %s36
    %s60 = sphi 0, %s62
    %s63 = sphi 0, %s60
    %s64 = sphi 0, %s63
    %s80 = sphi 0, %s64
    %s86 = sphi 0, %s88
    %s89 = sphi 0, %s86
    %s90 = sphi 0, %s89
    %s106 = sphi 0, %s90
  $region4: #{joint_edge_seg_loss.5} parent=0 // loop_header_branch
    %11 = sbr.rel (%p9) target = $region8
  $region5: #{joint_edge_seg_loss.5} parent=0 // loop_body
    %s13 = ssub.s32 %s8, 1
    %s14 = ssub.s32 %s8, 2
    %s21 = sadd.s32 1, %s16
    %p22 = scmp.ge.s32.totalorder %s21, 1
    %s23 = scalar_select %p22, 0, %s21
    %s24 = sadd.s32 1, %s15
    %s25 = scalar_select %p22, %s24, %s15
    %p26 = scmp.ge.s32.totalorder %s25, 2
    %s27 = scalar_select %p26, 0, %s25
    %s28 = ssub.s32 %s15, %s27
    %s29 = ssub.s32 %s16, %s23
    %s30 = sor.u32 %s28, %s29
    %p31 = scmp.eq.s32.totalorder %s30, 0
    %s33 = sadd.s32 %s32, 1
    %s34 = scalar_select %p31, %s32, %s33
    %p37 = pneg %p31
    %p38 = scmp.eq.s32.totalorder %s8, 1
    %p39 = por %p37, %p38
    %p40 = scmp.ne.s32.totalorder %s32, %s35
    %p41 = scmp.eq.s32.totalorder %s8, 0
    %p42 = por %p40, %p41
    %p43 = scmp.ne.s32.totalorder %s32, %s35
    %p44 = scmp.eq.s32.totalorder %s13, 1
    %p45 = por %p43, %p44
    %p46 = scmp.ne.s32.totalorder %s35, %s36
    %p47 = scmp.eq.s32.totalorder %s13, 0
    %p48 = por %p46, %p47
    %p49 = scmp.ne.s32.totalorder %s35, %s36
    %p50 = scmp.eq.s32.totalorder %s14, 1
    %p51 = por %p49, %p50
    %p53 = scmp.ne.s32.totalorder %s36, %s52
    %p54 = scmp.eq.s32.totalorder %s14, 0
    %p55 = por %p53, %p54
    %s56 = ssub.s32 %s15, %s27
    %s57 = ssub.s32 %s16, %s23
    %s58 = sor.u32 %s56, %s57
    %p59 = scmp.eq.s32.totalorder %s58, 0
    %s61 = sadd.s32 %s60, 1
    %s62 = scalar_select %p59, %s60, %s61
    %p65 = pneg %p59
    %p66 = scmp.eq.s32.totalorder %s8, 1
    %p67 = por %p65, %p66
    %p68 = scmp.ne.s32.totalorder %s60, %s63
    %p69 = scmp.eq.s32.totalorder %s8, 0
    %p70 = por %p68, %p69
    %p71 = scmp.ne.s32.totalorder %s60, %s63
    %p72 = scmp.eq.s32.totalorder %s13, 1
    %p73 = por %p71, %p72
    %p74 = scmp.ne.s32.totalorder %s63, %s64
    %p75 = scmp.eq.s32.totalorder %s13, 0
    %p76 = por %p74, %p75
    %p77 = scmp.ne.s32.totalorder %s63, %s64
    %p78 = scmp.eq.s32.totalorder %s14, 1
    %p79 = por %p77, %p78
    %p81 = scmp.ne.s32.totalorder %s64, %s80
    %p82 = scmp.eq.s32.totalorder %s14, 0
    %p83 = por %p81, %p82
    %s84 = ssub.s32 %s15, %s27
    %p85 = scmp.eq.s32.totalorder %s84, 0
    %s87 = sadd.s32 %s86, 1
    %s88 = scalar_select %p85, %s86, %s87
    %p91 = pneg %p85
    %p92 = scmp.eq.s32.totalorder %s8, 1
    %p93 = por %p91, %p92
    %p94 = scmp.ne.s32.totalorder %s86, %s89
    %p95 = scmp.eq.s32.totalorder %s8, 0
    %p96 = por %p94, %p95
    %p97 = scmp.ne.s32.totalorder %s86, %s89
    %p98 = scmp.eq.s32.totalorder %s13, 1
    %p99 = por %p97, %p98
    %p100 = scmp.ne.s32.totalorder %s89, %s90
    %p101 = scmp.eq.s32.totalorder %s13, 0
    %p102 = por %p100, %p101
    %p103 = scmp.ne.s32.totalorder %s89, %s90
    %p104 = scmp.eq.s32.totalorder %s14, 1
    %p105 = por %p103, %p104
    %p107 = scmp.ne.s32.totalorder %s90, %s106
    %p108 = scmp.eq.s32.totalorder %s14, 0
    %p109 = por %p107, %p108
    %p110 = scmp.le.s32.totalorder 1, %s8
    %p111 = scmp.lt.s32.totalorder %s8, 3
    %p112 = pnand %p110, %p111
    %p113 = pneg %p112
    // Predicated region
    $region9: #{joint_edge_seg_loss.5} parent=5 // pred_check
      _
    $region10: #{joint_edge_seg_loss.5} parent=5 // pred_check_branch
      %115 = sbr.rel (%p112) target = $region12
    $region11: #{joint_edge_seg_loss.5} parent=5 // pred_region
      %s116 = ssub.s32 %s8, 1
    $region12: #{joint_edge_seg_loss.5} parent=5 // pred_fallthru
      _
    %p117 = scmp.lt.s32.totalorder %s8, 2
    // Predicated region
    $region13: #{joint_edge_seg_loss.5} parent=5 // pred_check
      %p118 = pneg %p117
    $region14: #{joint_edge_seg_loss.5} parent=5 // pred_check_branch
      %120 = sbr.rel (%p118) target = $region16
    $region15: #{joint_edge_seg_loss.5} parent=5 // pred_region
      // Predicated region
      $region17: #{joint_edge_seg_loss.5} parent=15 // pred_check
        %p121 = pneg %p42
      $region18: #{joint_edge_seg_loss.5} parent=15 // pred_check_branch
        %123 = sbr.rel (%p121) target = $region20
      $region19: #{joint_edge_seg_loss.5} parent=15 // pred_region
        %s124 = smul.u32 2, %s16
        %p125 = scmp.lt.s32.totalorder %s15, 1
        %s126 = scalar_select %p125, %s15, 1
        %p127 = scmp.lt.s32.totalorder %s124, 1
        %s128 = scalar_select %p127, %s124, 1
        %s129 = smul.addr %s126, 2
        %s130 = sadd.s32 %s128, %s129
        %s131 = smul.addr %s130, 8
        %s132 = scalar_lea.vmem %s0, %s131
        %s133 = smul.u32 2, %s16
      $region20: #{joint_edge_seg_loss.5} parent=15 // pred_fallthru
        _
      // Predicated region
      $region21: #{joint_edge_seg_loss.5} parent=15 // pred_check
        %p134 = pneg %p70
      $region22: #{joint_edge_seg_loss.5} parent=15 // pred_check_branch
        %136 = sbr.rel (%p134) target = $region24
      $region23: #{joint_edge_seg_loss.5} parent=15 // pred_region
        %s137 = smul.u32 2, %s16
        %p138 = scmp.lt.s32.totalorder %s15, 1
        %s139 = scalar_select %p138, %s15, 1
        %p140 = scmp.lt.s32.totalorder %s137, 1
        %s141 = scalar_select %p140, %s137, 1
        %s142 = smul.addr %s139, 2
        %s143 = sadd.s32 %s141, %s142
        %s144 = smul.addr %s143, 8
        %s145 = scalar_lea.vmem %s1, %s144
        %s146 = smul.u32 2, %s16
      $region24: #{joint_edge_seg_loss.5} parent=15 // pred_fallthru
        _
    $region16: #{joint_edge_seg_loss.5} parent=5 // pred_fallthru
      _
    %p147 = scmp.le.s32.totalorder 1, %s8
    %p148 = scmp.lt.s32.totalorder %s8, 3
    %p149 = pnand %p147, %p148
    %p150 = pneg %p149
    // Predicated region
    $region25: #{joint_edge_seg_loss.5} parent=5 // pred_check
      _
    $region26: #{joint_edge_seg_loss.5} parent=5 // pred_check_branch
      %152 = sbr.rel (%p149) target = $region28
    $region27: #{joint_edge_seg_loss.5} parent=5 // pred_region
      %s153 = ssub.s32 %s8, 1
      %s154 = smul.u32 2, %s18
      %p155 = scmp.lt.s32.totalorder %s17, 1
      %s156 = scalar_select %p155, %s17, 1
      %p157 = scmp.lt.s32.totalorder %s154, 1
      %s158 = scalar_select %p157, %s154, 1
      %s159 = smul.addr %s156, 2
      %s160 = sadd.s32 %s158, %s159
      %s161 = smul.addr %s160, 8
      %s162 = scalar_lea.vmem %s0, %s161
      %p163 = pneg %p48
      %p164 = pneg %p45
      %s165 = smul.u32 2, %s18
      %p166 = scmp.lt.s32.totalorder %s17, 1
      %s167 = scalar_select %p166, %s17, 1
      %p168 = scmp.lt.s32.totalorder %s165, 1
      %s169 = scalar_select %p168, %s165, 1
      %s170 = smul.addr %s167, 2
      %s171 = sadd.s32 %s169, %s170
      %s172 = smul.addr %s171, 8
      %s173 = scalar_lea.vmem %s1, %s172
      %p174 = pneg %p76
      %p175 = pneg %p73
      %p176 = pneg %p102
      %p177 = pneg %p99
      %p178 = scmp.lt.s32.totalorder %s17, 1
      %s179 = scalar_select %p178, %s17, 1
      %s180 = smul.addr %s179, 4
      %s181 = scalar_lea.vmem %s2, %s180
      %s182 = smul.u32 2, %s18
      %p183 = scmp.lt.s32.totalorder %s17, 1
      %s184 = scalar_select %p183, %s17, 1
      %p185 = scmp.lt.s32.totalorder %s182, 1
      %s186 = scalar_select %p185, %s182, 1
      %s187 = smul.addr %s184, 2
      %s188 = sadd.s32 %s186, %s187
      %s189 = smul.addr %s188, 8
      %s190 = scalar_lea.vmem %s0, %s189
      %s191 = smul.u32 2, %s18
      %s192 = smul.u32 2, %s18
      %p193 = scmp.lt.s32.totalorder %s17, 1
      %s194 = scalar_select %p193, %s17, 1
      %p195 = scmp.lt.s32.totalorder %s192, 1
      %s196 = scalar_select %p195, %s192, 1
      %s197 = smul.addr %s194, 2
      %s198 = sadd.s32 %s196, %s197
      %s199 = smul.addr %s198, 8
      %s200 = scalar_lea.vmem %s1, %s199
      %s201 = smul.u32 2, %s18
      %p202 = scmp.lt.s32.totalorder %s17, 1
      %s203 = scalar_select %p202, %s17, 1
      %s204 = smul.addr %s203, 4
      %s205 = scalar_lea.vmem %s2, %s204
      %p206 = scmp.eq.s32.totalorder %s18, 0
      // Predicated region
      $region29: #{joint_edge_seg_loss.5} parent=27 // pred_check
        %p207 = pneg %p206
      $region30: #{joint_edge_seg_loss.5} parent=27 // pred_check_branch
        %209 = sbr.rel (%p207) target = $region32
      $region31: #{joint_edge_seg_loss.5} parent=27 // pred_region
        %vm210 = vcmask 125952
        %211 = vst.msk [vmem:[%s205] sm:$0xf] %vm210, 0.0
      $region32: #{joint_edge_seg_loss.5} parent=27 // pred_fallthru
        _
      %v212 = vld [vmem:[%s190] sm:$0xff]
      %v213 = vld [vmem:[%s190 + $0x8] sm:$0xff]
      %v214 = vld [vmem:[%s200] sm:$0xff]
      %v215 = vld [vmem:[%s200 + $0x8] sm:$0xff]
      %v216 = vlaneseq
      %v217 = vshrl.u32 %v216, 7
      %v218 = vadd.s32 %v217, 8
      %s219 = smul.u32 %s18, 16
      %v220 = vstv %s219
      %v221 = vadd.s32 %v220, %v217
      %v222 = vadd.s32 %v220, %v218
      %vm223 = vcmp.lt.s32.totalorder %v221, 16
      %vm224 = vcmp.lt.s32.totalorder %v222, 16
      %v225 = vmax.f32 %v212, 0.0
      %v226 = vmax.f32 %v213, 0.0
      %v227 = vmul.f32 %v212, %v214
      %v228 = vmul.f32 %v213, %v215
      %v229 = vsub.f32 %v225, %v227
      %v230 = vsub.f32 %v226, %v228
      %v231 = vand.u32 2147483647, %v212
      %v232 = vand.u32 2147483647, %v213
      %v233 = vsub.f32 0.0, %v231
      %v234 = vsub.f32 0.0, %v232
      %v235 = vmul.f32 %v233, 1.442695
      %v236 = vpow.pop %v235
      %v237 = vmul.f32 %v234, 1.442695
      %v238 = vpow.pop %v237
      %v239 = vadd.f32 %v236, 1.0
      %v240 = vlog2.pop %v239
      %v241 = vmul.f32 %v240, 0.6931472
      %v242 = vmul.f32 -0.5, %v236
      %v243 = vadd.f32 %v242, 1.0
      %v244 = vmul.f32 %v243, %v236
      %v245 = vand.u32 2147483647, %v236
      %vm246 = vcmp.lt.f32.partialorder %v245, 0.0004427343
      %v247 = vsel %vm246, %v244, %v241
      %v248 = vadd.f32 %v238, 1.0
      %v249 = vlog2.pop %v248
      %v250 = vmul.f32 %v249, 0.6931472
      %v251 = vmul.f32 -0.5, %v238
      %v252 = vadd.f32 %v251, 1.0
      %v253 = vmul.f32 %v252, %v238
      %v254 = vand.u32 2147483647, %v238
      %vm255 = vcmp.lt.f32.partialorder %v254, 0.0004427343
      %v256 = vsel %vm255, %v253, %v250
      %v257 = vadd.f32 %v229, %v247
      %v258 = vadd.f32 %v230, %v256
      %vm259 = vcmp.eq.f32.partialorder %v214, 1.0
      %vm260 = vcmp.eq.f32.partialorder %v215, 1.0
      %vm261 = vmand %vm223, %vm259
      %vm262 = vmand %vm224, %vm260
      %vm263 = vcmp.eq.f32.partialorder %v214, 0.0
      %vm264 = vcmp.eq.f32.partialorder %v215, 0.0
      %vm265 = vmand %vm223, %vm263
      %vm266 = vmand %vm224, %vm264
      %v267 = vld [vmem:[%s205] sm:$0xf]
      %v268 = vsel %vm261, %v257, 0.0
      %v269 = vsel %vm262, %v258, 0.0
      %vm270 = vcmask 130048
      %v271 = vsel %vm270, %v268, 0.0
      %v272 = vsel %vm270, %v269, 0.0
      %v273 = vadd.f32 %v271, %v272
      %v274 = vrot.slane %v273, 4
      %v275 = vadd.f32 %v273, %v274
      %v276 = vrot.slane %v275, 2
      %v277 = vadd.f32 %v275, %v276
      %v278 = vrot.slane %v277, 1
      %v279 = vadd.f32 %v277, %v278
      %v280 = vsel %vm265, %v257, 0.0
      %v281 = vsel %vm266, %v258, 0.0
      %v282 = vsel %vm270, %v280, 0.0
      %v283 = vsel %vm270, %v281, 0.0
      %v284 = vadd.f32 %v282, %v283
      %v285 = vrot.slane %v284, 4
      %v286 = vadd.f32 %v284, %v285
      %v287 = vrot.slane %v286, 2
      %v288 = vadd.f32 %v286, %v287
      %v289 = vrot.slane %v288, 1
      %v290 = vadd.f32 %v288, %v289
      %v291 = vsel %vm261, 1.0, 0.0
      %v292 = vsel %vm262, 1.0, 0.0
      %v293 = vsel %vm270, %v291, 0.0
      %v294 = vsel %vm270, %v292, 0.0
      %v295 = vadd.f32 %v293, %v294
      %v296 = vrot.slane %v295, 4
      %v297 = vadd.f32 %v295, %v296
      %v298 = vrot.slane %v297, 2
      %v299 = vadd.f32 %v297, %v298
      %v300 = vrot.slane %v299, 1
      %v301 = vadd.f32 %v299, %v300
      %v302 = vsel %vm265, 1.0, 0.0
      %v303 = vsel %vm266, 1.0, 0.0
      %v304 = vsel %vm270, %v302, 0.0
      %v305 = vsel %vm270, %v303, 0.0
      %v306 = vadd.f32 %v304, %v305
      %v307 = vrot.slane %v306, 4
      %v308 = vadd.f32 %v306, %v307
      %v309 = vrot.slane %v308, 2
      %v310 = vadd.f32 %v308, %v309
      %v311 = vrot.slane %v310, 1
      %v312 = vadd.f32 %v310, %v311
      %vm313 = vcmp.eq.s32.totalorder %v217, 2
      %v314 = vsel %vm313, %v301, %v312
      %vm315 = vcmp.eq.s32.totalorder %v217, 1
      %v316 = vsel %vm315, %v290, %v314
      %vm317 = vcmp.eq.s32.totalorder %v217, 0
      %v318 = vsel %vm317, %v279, %v316
      %v319 = vadd.f32 %v267, %v318
      %vm320 = vcmask 125952
      %321 = vst.msk [vmem:[%s205] sm:$0xf] %vm320, %v319
      %p322 = scmp.lt.s32.totalorder %s17, 1
      %s323 = scalar_select %p322, %s17, 1
      %s324 = smul.addr %s323, 4
      %s325 = scalar_lea.vmem %s2, %s324
      // Predicated region
      $region33: #{joint_edge_seg_loss.5} parent=27 // pred_check
        %p326 = pneg %p99
      $region34: #{joint_edge_seg_loss.5} parent=27 // pred_check_branch
        %328 = sbr.rel (%p326) target = $region36
      $region35: #{joint_edge_seg_loss.5} parent=27 // pred_region
        _
      $region36: #{joint_edge_seg_loss.5} parent=27 // pred_fallthru
        _
    $region28: #{joint_edge_seg_loss.5} parent=5 // pred_fallthru
      _
    %p329 = scmp.le.s32.totalorder 2, %s8
    // Predicated region
    $region37: #{joint_edge_seg_loss.5} parent=5 // pred_check
      %p330 = pneg %p329
    $region38: #{joint_edge_seg_loss.5} parent=5 // pred_check_branch
      %332 = sbr.rel (%p330) target = $region40
    $region39: #{joint_edge_seg_loss.5} parent=5 // pred_region
      %s333 = ssub.s32 %s8, 2
      // Predicated region
      $region41: #{joint_edge_seg_loss.5} parent=39 // pred_check
        %p334 = pneg %p105
      $region42: #{joint_edge_seg_loss.5} parent=39 // pred_check_branch
        %336 = sbr.rel (%p334) target = $region44
      $region43: #{joint_edge_seg_loss.5} parent=39 // pred_region
        %p337 = scmp.lt.s32.totalorder %s19, 1
        %s338 = scalar_select %p337, %s19, 1
        %s339 = smul.addr %s338, 4
        %s340 = scalar_lea.vmem %s2, %s339
      $region44: #{joint_edge_seg_loss.5} parent=39 // pred_fallthru
        _
    $region40: #{joint_edge_seg_loss.5} parent=5 // pred_fallthru
      _
  $region6: #{joint_edge_seg_loss.5} parent=0 // loop_footer
    %s12 = sadd.s32 1, %s8
  $region7: #{joint_edge_seg_loss.5} parent=0 // loop_footer_branch
    %7 = sbr.rel target = $region3
  $region8: #{joint_edge_seg_loss.5} parent=0 // loop_exit
    _

// kernel: joint_edge_seg_loss.4
$region0: #{joint_edge_seg_loss.4}
  #allocation0 [shape = 'u32[]', space=smem, size = 0x4, offset = 0x4, fixed_abs, tag = 'smem constant byte address 0x4 - core index']
  #allocation1 [shape = 'u32[72,128]{1,0:T(1,128)}', space=vmem, size = 0x9000, scoped, tag = 'internal scratch']
  %s0 = inlined_call_operand.vmem [shape: f32[2,4,256], index: 0, kind: input, shape index: {}]
  %s1 = inlined_call_operand.vmem [shape: f32[2,5,256], index: 1, kind: input, shape index: {}]
  %s2 = inlined_call_operand.vmem [shape: f32[2,4,1], index: 2, kind: input, shape index: {}]
  %s3 = inlined_call_operand.vmem [shape: f32[1,256], index: 3, kind: input, shape index: {}]
  %s4 = inlined_call_operand.vmem [shape: f32[2,1,256], index: 4, kind: output, shape index: {}]
  %s5 = sld [smem:[#allocation0]]
  $region53: #{joint_edge_seg_loss.4} parent=0
    _
  %s7 = ssub.s32 1, %s5
  %s8 = scalar_select 0, %s7, %s5
  loop: start=0, step=1, limit=4
  $region2: #{joint_edge_seg_loss.4} parent=0 // loop_pre_header
    _
  $region3: #{joint_edge_seg_loss.4} parent=0 // loop_header
    %s10 = sphi 0, %s14
    %p11 = scmp.ge.s32.totalorder %s10, 4
    %s17 = sphi 0, %s29
    %s18 = sphi 0, %s25
    %s19 = sphi 0, %s17
    %s20 = sphi 0, %s18
    %s21 = sphi 0, %s19
    %s22 = sphi 0, %s20
    %s34 = sphi 0, %s36
    %s37 = sphi 0, %s34
    %s38 = sphi 0, %s37
    %s54 = sphi 0, %s38
    %s62 = sphi 0, %s64
    %s65 = sphi 0, %s62
    %s66 = sphi 0, %s65
    %s82 = sphi 0, %s66
    %s88 = sphi 0, %s90
    %s91 = sphi 0, %s88
    %s92 = sphi 0, %s91
    %s108 = sphi 0, %s92
    %s114 = sphi 0, %s116
    %s117 = sphi 0, %s114
    %s118 = sphi 0, %s117
    %s134 = sphi 0, %s118
    %s140 = sphi 0, %s142
    %s143 = sphi 0, %s140
    %s144 = sphi 0, %s143
    %s160 = sphi 0, %s144
  $region4: #{joint_edge_seg_loss.4} parent=0 // loop_header_branch
    %13 = sbr.rel (%p11) target = $region8
  $region5: #{joint_edge_seg_loss.4} parent=0 // loop_body
    %s15 = ssub.s32 %s10, 1
    %s16 = ssub.s32 %s10, 2
    %s23 = sadd.s32 1, %s18
    %p24 = scmp.ge.s32.totalorder %s23, 1
    %s25 = scalar_select %p24, 0, %s23
    %s26 = sadd.s32 1, %s17
    %s27 = scalar_select %p24, %s26, %s17
    %p28 = scmp.ge.s32.totalorder %s27, 2
    %s29 = scalar_select %p28, 0, %s27
    %s30 = ssub.s32 %s17, %s29
    %s31 = ssub.s32 %s18, %s25
    %s32 = sor.u32 %s30, %s31
    %p33 = scmp.eq.s32.totalorder %s32, 0
    %s35 = sadd.s32 %s34, 1
    %s36 = scalar_select %p33, %s34, %s35
    %p39 = pneg %p33
    %p40 = scmp.eq.s32.totalorder %s10, 1
    %p41 = por %p39, %p40
    %p42 = scmp.ne.s32.totalorder %s34, %s37
    %p43 = scmp.eq.s32.totalorder %s10, 0
    %p44 = por %p42, %p43
    %p45 = scmp.ne.s32.totalorder %s34, %s37
    %p46 = scmp.eq.s32.totalorder %s15, 1
    %p47 = por %p45, %p46
    %p48 = scmp.ne.s32.totalorder %s37, %s38
    %p49 = scmp.eq.s32.totalorder %s15, 0
    %p50 = por %p48, %p49
    %p51 = scmp.ne.s32.totalorder %s37, %s38
    %p52 = scmp.eq.s32.totalorder %s16, 1
    %p53 = por %p51, %p52
    %p55 = scmp.ne.s32.totalorder %s38, %s54
    %p56 = scmp.eq.s32.totalorder %s16, 0
    %p57 = por %p55, %p56
    %s58 = ssub.s32 %s17, %s29
    %s59 = ssub.s32 %s18, %s25
    %s60 = sor.u32 %s58, %s59
    %p61 = scmp.eq.s32.totalorder %s60, 0
    %s63 = sadd.s32 %s62, 1
    %s64 = scalar_select %p61, %s62, %s63
    %p67 = pneg %p61
    %p68 = scmp.eq.s32.totalorder %s10, 1
    %p69 = por %p67, %p68
    %p70 = scmp.ne.s32.totalorder %s62, %s65
    %p71 = scmp.eq.s32.totalorder %s10, 0
    %p72 = por %p70, %p71
    %p73 = scmp.ne.s32.totalorder %s62, %s65
    %p74 = scmp.eq.s32.totalorder %s15, 1
    %p75 = por %p73, %p74
    %p76 = scmp.ne.s32.totalorder %s65, %s66
    %p77 = scmp.eq.s32.totalorder %s15, 0
    %p78 = por %p76, %p77
    %p79 = scmp.ne.s32.totalorder %s65, %s66
    %p80 = scmp.eq.s32.totalorder %s16, 1
    %p81 = por %p79, %p80
    %p83 = scmp.ne.s32.totalorder %s66, %s82
    %p84 = scmp.eq.s32.totalorder %s16, 0
    %p85 = por %p83, %p84
    %s86 = ssub.s32 %s17, %s29
    %p87 = scmp.eq.s32.totalorder %s86, 0
    %s89 = sadd.s32 %s88, 1
    %s90 = scalar_select %p87, %s88, %s89
    %p93 = pneg %p87
    %p94 = scmp.eq.s32.totalorder %s10, 1
    %p95 = por %p93, %p94
    %p96 = scmp.ne.s32.totalorder %s88, %s91
    %p97 = scmp.eq.s32.totalorder %s10, 0
    %p98 = por %p96, %p97
    %p99 = scmp.ne.s32.totalorder %s88, %s91
    %p100 = scmp.eq.s32.totalorder %s15, 1
    %p101 = por %p99, %p100
    %p102 = scmp.ne.s32.totalorder %s91, %s92
    %p103 = scmp.eq.s32.totalorder %s15, 0
    %p104 = por %p102, %p103
    %p105 = scmp.ne.s32.totalorder %s91, %s92
    %p106 = scmp.eq.s32.totalorder %s16, 1
    %p107 = por %p105, %p106
    %p109 = scmp.ne.s32.totalorder %s92, %s108
    %p110 = scmp.eq.s32.totalorder %s16, 0
    %p111 = por %p109, %p110
    %s112 = ssub.s32 %s18, %s25
    %p113 = scmp.eq.s32.totalorder %s112, 0
    %s115 = sadd.s32 %s114, 1
    %s116 = scalar_select %p113, %s114, %s115
    %p119 = pneg %p113
    %p120 = scmp.eq.s32.totalorder %s10, 1
    %p121 = por %p119, %p120
    %p122 = scmp.ne.s32.totalorder %s114, %s117
    %p123 = scmp.eq.s32.totalorder %s10, 0
    %p124 = por %p122, %p123
    %p125 = scmp.ne.s32.totalorder %s114, %s117
    %p126 = scmp.eq.s32.totalorder %s15, 1
    %p127 = por %p125, %p126
    %p128 = scmp.ne.s32.totalorder %s117, %s118
    %p129 = scmp.eq.s32.totalorder %s15, 0
    %p130 = por %p128, %p129
    %p131 = scmp.ne.s32.totalorder %s117, %s118
    %p132 = scmp.eq.s32.totalorder %s16, 1
    %p133 = por %p131, %p132
    %p135 = scmp.ne.s32.totalorder %s118, %s134
    %p136 = scmp.eq.s32.totalorder %s16, 0
    %p137 = por %p135, %p136
    %s138 = ssub.s32 %s17, %s29
    %p139 = scmp.eq.s32.totalorder %s138, 0
    %s141 = sadd.s32 %s140, 1
    %s142 = scalar_select %p139, %s140, %s141
    %p145 = pneg %p139
    %p146 = scmp.eq.s32.totalorder %s10, 1
    %p147 = por %p145, %p146
    %p148 = scmp.ne.s32.totalorder %s140, %s143
    %p149 = scmp.eq.s32.totalorder %s10, 0
    %p150 = por %p148, %p149
    %p151 = scmp.ne.s32.totalorder %s140, %s143
    %p152 = scmp.eq.s32.totalorder %s15, 1
    %p153 = por %p151, %p152
    %p154 = scmp.ne.s32.totalorder %s143, %s144
    %p155 = scmp.eq.s32.totalorder %s15, 0
    %p156 = por %p154, %p155
    %p157 = scmp.ne.s32.totalorder %s143, %s144
    %p158 = scmp.eq.s32.totalorder %s16, 1
    %p159 = por %p157, %p158
    %p161 = scmp.ne.s32.totalorder %s144, %s160
    %p162 = scmp.eq.s32.totalorder %s16, 0
    %p163 = por %p161, %p162
    %p164 = scmp.le.s32.totalorder 1, %s10
    %p165 = scmp.lt.s32.totalorder %s10, 3
    %p166 = pnand %p164, %p165
    %p167 = pneg %p166
    // Predicated region
    $region9: #{joint_edge_seg_loss.4} parent=5 // pred_check
      _
    $region10: #{joint_edge_seg_loss.4} parent=5 // pred_check_branch
      %169 = sbr.rel (%p166) target = $region12
    $region11: #{joint_edge_seg_loss.4} parent=5 // pred_region
      %s170 = ssub.s32 %s10, 1
      // Predicated region
      $region13: #{joint_edge_seg_loss.4} parent=11 // pred_check
        %p171 = pneg %p130
      $region14: #{joint_edge_seg_loss.4} parent=11 // pred_check_branch
        %173 = sbr.rel (%p171) target = $region16
      $region15: #{joint_edge_seg_loss.4} parent=11 // pred_region
        %s174 = smul.u32 2, %s20
        %p175 = scmp.lt.s32.totalorder %s174, 1
        %s176 = scalar_select %p175, %s174, 1
        %s177 = scalar_lea.vmem %s3, %s176
        %s178 = smul.u32 2, %s20
      $region16: #{joint_edge_seg_loss.4} parent=11 // pred_fallthru
        _
    $region12: #{joint_edge_seg_loss.4} parent=5 // pred_fallthru
      _
    %p179 = scmp.lt.s32.totalorder %s10, 2
    // Predicated region
    $region17: #{joint_edge_seg_loss.4} parent=5 // pred_check
      %p180 = pneg %p179
    $region18: #{joint_edge_seg_loss.4} parent=5 // pred_check_branch
      %182 = sbr.rel (%p180) target = $region20
    $region19: #{joint_edge_seg_loss.4} parent=5 // pred_region
      // Predicated region
      $region21: #{joint_edge_seg_loss.4} parent=19 // pred_check
        %p183 = pneg %p44
      $region22: #{joint_edge_seg_loss.4} parent=19 // pred_check_branch
        %185 = sbr.rel (%p183) target = $region24
      $region23: #{joint_edge_seg_loss.4} parent=19 // pred_region
        %s186 = smul.u32 2, %s18
        %p187 = scmp.lt.s32.totalorder %s17, 1
        %s188 = scalar_select %p187, %s17, 1
        %p189 = scmp.lt.s32.totalorder %s186, 1
        %s190 = scalar_select %p189, %s186, 1
        %s191 = smul.addr %s188, 2
        %s192 = sadd.s32 %s190, %s191
        %s193 = smul.addr %s192, 4
        %s194 = scalar_lea.vmem %s0, %s193
        %s195 = smul.u32 2, %s18
      $region24: #{joint_edge_seg_loss.4} parent=19 // pred_fallthru
        _
      // Predicated region
      $region25: #{joint_edge_seg_loss.4} parent=19 // pred_check
        %p196 = pneg %p72
      $region26: #{joint_edge_seg_loss.4} parent=19 // pred_check_branch
        %198 = sbr.rel (%p196) target = $region28
      $region27: #{joint_edge_seg_loss.4} parent=19 // pred_region
        %s199 = smul.u32 2, %s18
        %p200 = scmp.lt.s32.totalorder %s17, 1
        %s201 = scalar_select %p200, %s17, 1
        %p202 = scmp.lt.s32.totalorder %s199, 1
        %s203 = scalar_select %p202, %s199, 1
        %s204 = smul.addr %s201, 2
        %s205 = sadd.s32 %s203, %s204
        %s206 = smul.addr %s205, 8
        %s207 = scalar_lea.vmem %s1, %s206
        %s208 = smul.u32 2, %s18
      $region28: #{joint_edge_seg_loss.4} parent=19 // pred_fallthru
        _
      // Predicated region
      $region29: #{joint_edge_seg_loss.4} parent=19 // pred_check
        %p209 = pneg %p98
      $region30: #{joint_edge_seg_loss.4} parent=19 // pred_check_branch
        %211 = sbr.rel (%p209) target = $region32
      $region31: #{joint_edge_seg_loss.4} parent=19 // pred_region
        %p212 = scmp.lt.s32.totalorder %s17, 1
        %s213 = scalar_select %p212, %s17, 1
        %s214 = smul.addr %s213, 4
        %s215 = scalar_lea.vmem %s2, %s214
      $region32: #{joint_edge_seg_loss.4} parent=19 // pred_fallthru
        _
    $region20: #{joint_edge_seg_loss.4} parent=5 // pred_fallthru
      _
    %p216 = scmp.le.s32.totalorder 1, %s10
    %p217 = scmp.lt.s32.totalorder %s10, 3
    %p218 = pnand %p216, %p217
    %p219 = pneg %p218
    // Predicated region
    $region33: #{joint_edge_seg_loss.4} parent=5 // pred_check
      _
    $region34: #{joint_edge_seg_loss.4} parent=5 // pred_check_branch
      %221 = sbr.rel (%p218) target = $region36
    $region35: #{joint_edge_seg_loss.4} parent=5 // pred_region
      %s222 = ssub.s32 %s10, 1
      %s223 = smul.u32 2, %s20
      %p224 = scmp.lt.s32.totalorder %s19, 1
      %s225 = scalar_select %p224, %s19, 1
      %p226 = scmp.lt.s32.totalorder %s223, 1
      %s227 = scalar_select %p226, %s223, 1
      %s228 = smul.addr %s225, 2
      %s229 = sadd.s32 %s227, %s228
      %s230 = smul.addr %s229, 4
      %s231 = scalar_lea.vmem %s0, %s230
      %p232 = pneg %p50
      %p233 = pneg %p47
      %s234 = smul.u32 2, %s20
      %p235 = scmp.lt.s32.totalorder %s19, 1
      %s236 = scalar_select %p235, %s19, 1
      %p237 = scmp.lt.s32.totalorder %s234, 1
      %s238 = scalar_select %p237, %s234, 1
      %s239 = smul.addr %s236, 2
      %s240 = sadd.s32 %s238, %s239
      %s241 = smul.addr %s240, 8
      %s242 = scalar_lea.vmem %s1, %s241
      %p243 = pneg %p78
      %p244 = pneg %p75
      %p245 = scmp.lt.s32.totalorder %s19, 1
      %s246 = scalar_select %p245, %s19, 1
      %s247 = smul.addr %s246, 4
      %s248 = scalar_lea.vmem %s2, %s247
      %p249 = pneg %p104
      %p250 = pneg %p101
      %s251 = smul.u32 2, %s20
      %p252 = scmp.lt.s32.totalorder %s251, 1
      %s253 = scalar_select %p252, %s251, 1
      %s254 = scalar_lea.vmem %s3, %s253
      %p255 = pneg %p130
      %p256 = pneg %p127
      %p257 = pneg %p156
      %p258 = pneg %p153
      %p259 = scmp.lt.s32.totalorder %s19, 1
      %s260 = scalar_select %p259, %s19, 1
      %s261 = smul.addr %s260, 2
      %s262 = scalar_lea.vmem %s4, %s261
      %s263 = smul.u32 2, %s20
      %p264 = scmp.lt.s32.totalorder %s19, 1
      %s265 = scalar_select %p264, %s19, 1
      %p266 = scmp.lt.s32.totalorder %s263, 1
      %s267 = scalar_select %p266, %s263, 1
      %s268 = smul.addr %s265, 2
      %s269 = sadd.s32 %s267, %s268
      %s270 = smul.addr %s269, 4
      %s271 = scalar_lea.vmem %s0, %s270
      %s272 = smul.u32 2, %s20
      %s273 = smul.u32 2, %s20
      %p274 = scmp.lt.s32.totalorder %s19, 1
      %s275 = scalar_select %p274, %s19, 1
      %p276 = scmp.lt.s32.totalorder %s273, 1
      %s277 = scalar_select %p276, %s273, 1
      %s278 = smul.addr %s275, 2
      %s279 = sadd.s32 %s277, %s278
      %s280 = smul.addr %s279, 8
      %s281 = scalar_lea.vmem %s1, %s280
      %s282 = smul.u32 2, %s20
      %p283 = scmp.lt.s32.totalorder %s19, 1
      %s284 = scalar_select %p283, %s19, 1
      %s285 = smul.addr %s284, 4
      %s286 = scalar_lea.vmem %s2, %s285
      %s287 = smul.u32 2, %s20
      %p288 = scmp.lt.s32.totalorder %s287, 1
      %s289 = scalar_select %p288, %s287, 1
      %s290 = scalar_lea.vmem %s3, %s289
      %s291 = smul.u32 2, %s20
      %p292 = scmp.lt.s32.totalorder %s19, 1
      %s293 = scalar_select %p292, %s19, 1
      %s294 = smul.addr %s293, 2
      %s295 = scalar_lea.vmem %s4, %s294
      %p296 = scmp.eq.s32.totalorder %s20, 0
      // Predicated region
      $region37: #{joint_edge_seg_loss.4} parent=35 // pred_check
        %p297 = pneg %p296
      $region38: #{joint_edge_seg_loss.4} parent=35 // pred_check_branch
        %299 = sbr.rel (%p297) target = $region40
      $region39: #{joint_edge_seg_loss.4} parent=35 // pred_region
        %v300 = vlaneseq
        %vm301 = vcmp.ge.s32.totalorder %v300, 0
        %vm302 = vcmp.lt.s32.totalorder %v300, 256
        %vm303 = vmand %vm301, %vm302
        %304 = vst.msk [vmem:[%s295] sm:$0x3] %vm303, 0.0
      $region40: #{joint_edge_seg_loss.4} parent=35 // pred_fallthru
        _
      %v305 = vld [vmem:[%s271] sm:$0xff]
      %v306 = vld [vmem:[%s281] sm:$0xf]
      %v307 = vld [vmem:[%s281 + $0x8] sm:$0xf]
      %v308 = vld [vmem:[%s286] sm:$0xf]
      %310 = vst [vmem:[#allocation1] ss:$2 sm:$0xff] %v305
      %v311 = vld.sshfl [vmem:[#allocation1] sm:$0xff pattern:$0x75316420]
      %v312 = vld.sshfl [vmem:[#allocation1 + $0x8] sm:$0xff pattern:$0x75316420]
      %vm315 = vcmask 1043456
      %v316 = vsel %vm315, %v311, -inf
      %v317 = vrot.slane %v316, 4
      %v318 = vmax.f32 %v316, %v317
      %v319 = vrot.slane %v318, 2
      %v320 = vmax.f32 %v318, %v319
      %v321 = vrot.slane %v320, 1
      %v322 = vmax.f32 %v320, %v321
      %v323 = vsel %vm315, %v312, -inf
      %v324 = vrot.slane %v323, 4
      %v325 = vmax.f32 %v323, %v324
      %v326 = vrot.slane %v325, 2
      %v327 = vmax.f32 %v325, %v326
      %v328 = vrot.slane %v327, 1
      %v329 = vmax.f32 %v327, %v328
      %v332 = vrot.slane %v329, 4
      %v333 = vsel %vm315, %v322, %v332
      %v335 = vsub.f32 %v305, %v333
      %v336 = vmul.f32 %v335, 1.442695
      %v337 = vpow.pop %v336
      %339 = vst [vmem:[#allocation1] ss:$2 sm:$0xff] %v337
      %v340 = vld.sshfl [vmem:[#allocation1] sm:$0xff pattern:$0x75316420]
      %v341 = vld.sshfl [vmem:[#allocation1 + $0x8] sm:$0xff pattern:$0x75316420]
      %v344 = vsel %vm315, %v340, 0.0
      %v345 = vrot.slane %v344, 4
      %v346 = vadd.f32 %v344, %v345
      %v347 = vrot.slane %v346, 2
      %v348 = vadd.f32 %v346, %v347
      %v349 = vrot.slane %v348, 1
      %v350 = vadd.f32 %v348, %v349
      %v351 = vsel %vm315, %v341, 0.0
      %v352 = vrot.slane %v351, 4
      %v353 = vadd.f32 %v351, %v352
      %v354 = vrot.slane %v353, 2
      %v355 = vadd.f32 %v353, %v354
      %v356 = vrot.slane %v355, 1
      %v357 = vadd.f32 %v355, %v356
      %v358 = vlog2.pop %v350
      %v359 = vmul.f32 %v358, 0.6931472
      %v360 = vlog2.pop %v357
      %v361 = vmul.f32 %v360, 0.6931472
      %v364 = vrot.slane %v307, 4
      %v365 = vsel %vm315, %v306, %v364
      %v367 = vmul.f32 %v337, %v365
      %369 = vst [vmem:[#allocation1] ss:$2 sm:$0xff] %v367
      %v370 = vld.sshfl [vmem:[#allocation1] sm:$0xff pattern:$0x75316420]
      %v371 = vld.sshfl [vmem:[#allocation1 + $0x8] sm:$0xff pattern:$0x75316420]
      %v374 = vsel %vm315, %v370, 0.0
      %v375 = vrot.slane %v374, 4
      %v376 = vadd.f32 %v374, %v375
      %v377 = vrot.slane %v376, 2
      %v378 = vadd.f32 %v376, %v377
      %v379 = vrot.slane %v378, 1
      %v380 = vadd.f32 %v378, %v379
      %v381 = vsel %vm315, %v371, 0.0
      %v382 = vrot.slane %v381, 4
      %v383 = vadd.f32 %v381, %v382
      %v384 = vrot.slane %v383, 2
      %v385 = vadd.f32 %v383, %v384
      %v386 = vrot.slane %v385, 1
      %v387 = vadd.f32 %v385, %v386
      %v388 = vlog2.pop %v380
      %v389 = vmul.f32 %v388, 0.6931472
      %v390 = vlog2.pop %v387
      %v391 = vmul.f32 %v390, 0.6931472
      %v394 = vrot.slane %v391, 4
      %v395 = vsel %vm315, %v389, %v394
      %v397 = vmax.f32 %v335, %v395
      %v400 = vrot.slane %v361, 4
      %v401 = vsel %vm315, %v359, %v400
      %v403 = vsub.f32 %v397, %v401
      %405 = vset.pattern.permute.xlu0 0
      %406 = vperm.xlu0 %405, %v308
      %v407 = vpop.permute.xlu0 %406
      %v409 = vmul.f32 %v306, %v407
      %v410 = vmul.f32 %v307, %v407
      %412 = vst [vmem:[#allocation1] ss:$2 sm:$0xff] %v403
      %v413 = vld.sshfl [vmem:[#allocation1] sm:$0xff pattern:$0x75316420]
      %v414 = vld.sshfl [vmem:[#allocation1 + $0x8] sm:$0xff pattern:$0x75316420]
      %v417 = vmul.f32 %v409, %v413
      %v418 = vmul.f32 %v410, %v414
      %v419 = vsel %vm315, %v417, 0.0
      %v420 = vrot.slane %v419, 4
      %v421 = vadd.f32 %v419, %v420
      %v422 = vrot.slane %v421, 2
      %v423 = vadd.f32 %v421, %v422
      %v424 = vrot.slane %v423, 1
      %v425 = vadd.f32 %v423, %v424
      %v426 = vsel %vm315, %v418, 0.0
      %v427 = vrot.slane %v426, 4
      %v428 = vadd.f32 %v426, %v427
      %v429 = vrot.slane %v428, 2
      %v430 = vadd.f32 %v428, %v429
      %v431 = vrot.slane %v430, 1
      %v432 = vadd.f32 %v430, %v431
      %v433 = vsel %vm315, %v306, 0.0
      %v434 = vrot.slane %v433, 4
      %v435 = vadd.f32 %v433, %v434
      %v436 = vrot.slane %v435, 2
      %v437 = vadd.f32 %v435, %v436
      %v438 = vrot.slane %v437, 1
      %v439 = vadd.f32 %v437, %v438
      %v440 = vsel %vm315, %v307, 0.0
      %v441 = vrot.slane %v440, 4
      %v442 = vadd.f32 %v440, %v441
      %v443 = vrot.slane %v442, 2
      %v444 = vadd.f32 %v442, %v443
      %v445 = vrot.slane %v444, 1
      %v446 = vadd.f32 %v444, %v445
      %vm447 = vcmp.gt.f32.partialorder %v439, 0.0
      %vm448 = vcmp.gt.f32.partialorder %v446, 0.0
      %v449 = vlaneseq
      %v450 = vand.u32 %v449, 127
      %v451 = vadd.s32 %v450, 128
      %s452 = smul.u32 %s20, 256
      %v453 = vstv %s452
      %v454 = vadd.s32 %v453, %v450
      %v455 = vadd.s32 %v453, %v451
      %vm456 = vcmp.lt.s32.totalorder %v454, 256
      %vm457 = vcmp.lt.s32.totalorder %v455, 256
      %v458 = vld [vmem:[%s290] sm:$0x3]
      %v459 = vsub.f32 0.0, %v458
      %v462 = vrot.slane %v432, 7
      %vm463 = vcmask 1040384
      %v464 = vsel %vm463, %v425, %v462
      %v466 = vmul.f32 %v459, %v464
      %v467 = vld [vmem:[%s295] sm:$0x3]
      %vm468 = vmand %vm447, %vm456
      %vm469 = vmand %vm448, %vm457
      %v471 = vperm.slane %v466, 0
      %v472 = vperm.slane %v466, 1
      %v475 = vsel %vm468, %v471, 0.0
      %v476 = vsel %vm469, %v472, 0.0
      %v479 = vrot.slane %v476, 7
      %v480 = vsel %vm463, %v475, %v479
      %v482 = vadd.f32 %v467, %v480
      %v483 = vlaneseq
      %vm484 = vcmp.ge.s32.totalorder %v483, 0
      %vm485 = vcmp.lt.s32.totalorder %v483, 256
      %vm486 = vmand %vm484, %vm485
      %487 = vst.msk [vmem:[%s295] sm:$0x3] %vm486, %v482
      %p488 = scmp.lt.s32.totalorder %s19, 1
      %s489 = scalar_select %p488, %s19, 1
      %s490 = smul.addr %s489, 2
      %s491 = scalar_lea.vmem %s4, %s490
      // Predicated region
      $region41: #{joint_edge_seg_loss.4} parent=35 // pred_check
        %p492 = pneg %p153
      $region42: #{joint_edge_seg_loss.4} parent=35 // pred_check_branch
        %494 = sbr.rel (%p492) target = $region44
      $region43: #{joint_edge_seg_loss.4} parent=35 // pred_region
        _
      $region44: #{joint_edge_seg_loss.4} parent=35 // pred_fallthru
        _
    $region36: #{joint_edge_seg_loss.4} parent=5 // pred_fallthru
      _
    %p495 = scmp.le.s32.totalorder 2, %s10
    // Predicated region
    $region45: #{joint_edge_seg_loss.4} parent=5 // pred_check
      %p496 = pneg %p495
    $region46: #{joint_edge_seg_loss.4} parent=5 // pred_check_branch
      %498 = sbr.rel (%p496) target = $region48
    $region47: #{joint_edge_seg_loss.4} parent=5 // pred_region
      %s499 = ssub.s32 %s10, 2
      // Predicated region
      $region49: #{joint_edge_seg_loss.4} parent=47 // pred_check
        %p500 = pneg %p159
      $region50: #{joint_edge_seg_loss.4} parent=47 // pred_check_branch
        %502 = sbr.rel (%p500) target = $region52
      $region51: #{joint_edge_seg_loss.4} parent=47 // pred_region
        %p503 = scmp.lt.s32.totalorder %s21, 1
        %s504 = scalar_select %p503, %s21, 1
        %s505 = smul.addr %s504, 2
        %s506 = scalar_lea.vmem %s4, %s505
      $region52: #{joint_edge_seg_loss.4} parent=47 // pred_fallthru
        _
    $region48: #{joint_edge_seg_loss.4} parent=5 // pred_fallthru
      _
  $region6: #{joint_edge_seg_loss.4} parent=0 // loop_footer
    %s14 = sadd.s32 1, %s10
  $region7: #{joint_edge_seg_loss.4} parent=0 // loop_footer_branch
    %9 = sbr.rel target = $region3
  $region8: #{joint_edge_seg_loss.4} parent=0 // loop_exit
    _

</llo_original>
